<compile_context>
chip_gen: v5e
topology: v5e:2x2
jax: 0.10.0
libtpu: 0.0.40
codegen_flags: <defaults>
</compile_context>

<pallas_src>
import functools

import numpy as np
import jax
import jax.numpy as jnp
from jax.experimental import pallas as pl
from jax.experimental.pallas import tpu as pltpu

_INV_SQRT2 = 0.7071067811865476


# ----------------------------------------------------------------------------
# In-kernel math helpers
# ----------------------------------------------------------------------------

def _erf(x):
    # Abramowitz & Stegun 7.1.26, |err| <= 1.5e-7; exp runs on the EUP.
    p = 0.3275911
    a1, a2, a3, a4, a5 = 0.254829592, -0.284496736, 1.421413741, -1.453152027, 1.061405429
    sgn = jnp.where(x < 0.0, -1.0, 1.0)
    ax = jnp.abs(x)
    t = 1.0 / (1.0 + p * ax)
    poly = t * (a1 + t * (a2 + t * (a3 + t * (a4 + t * a5))))
    return sgn * (1.0 - poly * jnp.exp(-ax * ax))


def _gelu(x):
    # torch nn.GELU() default (exact erf form).
    return 0.5 * x * (1.0 + _erf(x * _INV_SQRT2))


# ----------------------------------------------------------------------------
# The fused kernel (whole forward pass, whole batch, no grid)
# ----------------------------------------------------------------------------

def fused_kernel(r1_ref, r2_ref, w_qkv_ref, w_hid_ref, w_out_ref, cst_ref, o_ref, *, meta):
    B, S, E, L = meta["B"], meta["S"], meta["E"], meta["L"]
    BSq = B * S
    f32, bf16 = jnp.float32, jnp.bfloat16

    def _load(ref, lay, name):
        r0, nr, nc = lay[name]           # static python ints -> free ref slice
        return ref[r0:r0 + nr, 0:nc]

    ld_qkv = functools.partial(_load, w_qkv_ref, meta["lay_qkv"])
    ld_hid = functools.partial(_load, w_hid_ref, meta["lay_hid"])
    ld_out = functools.partial(_load, w_out_ref, meta["lay_out"])
    cst = functools.partial(_load, cst_ref, meta["lay_cst"])

    r1 = r1_ref[...]                      # (B, S, E) f32
    r2 = r2_ref[...]
    r1f = r1.reshape(BSq, E)
    r2f = r2.reshape(BSq, E)

    # precomputed attention constants (f32)
    hm8 = cst("head_mask8")               # (H*B*S, E)   1 where column belongs to row's head
    ones8 = cst("ones8")                  # (H*B*S, H*B*S) block-diag ones (same head & batch)
    bias_x = cst("bias_cross")            # (B*S, H*B*S) 0 / -1e30 cross-batch mask
    bias_s = cst("bias_self")             # (B,   H*B*S)
    hm_p = cst("head_mask_pool")          # (H*5B, L)
    ones_p = cst("ones_pool")             # (H*5B, H*5B)
    bias_p = cst("bias_pool")             # (B,    H*5B)

    def attend(q, k, v, head_mask, ones_blk, bias):
        """Multi-head attention with ONE fused softmax.

        q: (Mq, E) pre-scaled queries; k, v: (Nk, E).  K/V are replicated per
        head and masked so a single (Mq, H*Nk) score matmul + one softmax +
        one (H*Nk, E) context matmul produce the head-concatenated output.
        """
        reps = head_mask.shape[0] // k.shape[0]                       # == num_heads
        kb = (jnp.concatenate([k] * reps, axis=0) * head_mask).astype(bf16)
        vb = (jnp.concatenate([v] * reps, axis=0) * head_mask).astype(bf16)
        s = jax.lax.dot_general(q.astype(bf16), kb,
                                dimension_numbers=(((1,), (1,)), ((), ())),
                                preferred_element_type=f32)           # (Mq, H*Nk)
        s = s + bias                                                  # -1e30 on invalid cols
        p = jnp.exp(s - jnp.max(s, axis=-1, keepdims=True))
        denom = jnp.dot(p, ones_blk, preferred_element_type=f32)      # per-(head,batch) sums
        attn = p / (denom + 1e-30)                                    # exact softmax weights
        return jnp.dot(attn.astype(bf16), vb, preferred_element_type=f32)   # (Mq, E)

    # ---- cross attention: one fused QKV projection per input tensor -------
    p1 = jnp.dot(r1f.astype(bf16), ld_qkv("w_a1"), preferred_element_type=f32) + cst("b_a1")
    p2 = jnp.dot(r2f.astype(bf16), ld_qkv("w_a2"), preferred_element_type=f32) + cst("b_a2")
    q_query, k_cand, v_cand = p1[:, 0:E], p1[:, E:2 * E], p1[:, 2 * E:3 * E]
    q_cand, k_query, v_query = p2[:, 0:E], p2[:, E:2 * E], p2[:, 2 * E:3 * E]

    ctx_c = attend(q_cand, k_cand, v_cand, hm8, ones8, bias_x)        # (B*S, E) cand branch
    ctx_q = attend(q_query, k_query, v_query, hm8, ones8, bias_x)     # (B*S, E) query branch

    # ---- self attention: cross out-proj folded into the QKV projection ----
    s1 = jnp.dot(ctx_c.astype(bf16), ld_qkv("w_b1"), preferred_element_type=f32) + cst("b_b1")
    s2 = jnp.dot(ctx_q.astype(bf16), ld_qkv("w_b2"), preferred_element_type=f32) + cst("b_b2")
    q_sc = s1.reshape(B, S, 3 * E)[:, 0, 0:E]                         # query = seq position 0
    q_sq = s2.reshape(B, S, 3 * E)[:, 0, 0:E]
    ctx_sc = attend(q_sc, s1[:, E:2 * E], s1[:, 2 * E:3 * E], hm8, ones8, bias_s)   # (B, E)
    ctx_sq = attend(q_sq, s2[:, E:2 * E], s2[:, 2 * E:3 * E], hm8, ones8, bias_s)

    # ---- MLP branches fused; self out-proj folded into layer 1 ------------
    ctx_both = jnp.concatenate([ctx_sc, ctx_sq], axis=0)              # (2B, E)
    cls_both = jnp.concatenate([r1[:, 0, :], r2[:, 0, :]], axis=0)    # (2B, E) CLS tokens
    b1 = ld_hid("b1_both").astype(f32)                                # (1, 2*hid)
    h1 = _gelu(jnp.dot(ctx_both.astype(bf16), ld_hid("w1_ctx"), preferred_element_type=f32)
               + jnp.dot(cls_both.astype(bf16), ld_hid("w1_cls"), preferred_element_type=f32)
               + b1)                                                  # (2B, 2*hid)
    y = _gelu(jnp.dot(h1.astype(bf16), ld_out("w2_bd"), preferred_element_type=f32)
              + cst("b2_both"))                                       # (2B, 2L) block-diag layer 2
    c = y[0:B, 0:L]                                                   # cand branch output
    qb = y[B:2 * B, L:2 * L]                                          # query branch output

    # ---- pooling attention over [max, cand, |cand-quer|, quer, cand*quer] --
    pool = jnp.concatenate([jnp.maximum(c, qb), c, jnp.abs(c - qb), qb, c * qb], axis=0)  # (5B, L)
    pk = jnp.dot(pool.astype(bf16), ld_out("w_pool_kv"), preferred_element_type=f32) + cst("b_pool_kv")
    ctx_p = attend(cst("q_pool"), pk[:, 0:L], pk[:, L:2 * L], hm_p, ones_p, bias_p)       # (B, L)
    logits = (jnp.dot(ctx_p.astype(bf16), ld_out("w_pool_out"), preferred_element_type=f32)
              + cst("b_pool_out"))                                    # (B, L)

    # ---- final nn.Softmax(dim=1) over the feature axis (exact division) ----
    logits = logits - jnp.max(logits, axis=-1, keepdims=True)
    ex = jnp.exp(logits)
    o_ref[...] = (ex / jnp.sum(ex, axis=-1, keepdims=True)).astype(o_ref.dtype)


# ----------------------------------------------------------------------------
# Host-side parameter preparation: weight composition, fusion and packing
# ----------------------------------------------------------------------------

def _pack_rows(entries, dtype, align):
    """Pack named 2-D (or 1-D) blocks into one (rows, width) slab, row-aligned."""
    blocks = [(name, np.atleast_2d(np.asarray(a, np.float32))) for name, a in entries]
    width = max(b.shape[1] for _, b in blocks)
    layout, rows, r = {}, [], 0
    for name, b in blocks:
        nr, nc = b.shape
        nr_pad = ((nr + align - 1) // align) * align
        buf = np.zeros((nr_pad, width), np.float32)
        buf[:nr, :nc] = b
        rows.append(buf)
        layout[name] = (r, nr, nc)
        r += nr_pad
    return jnp.asarray(np.concatenate(rows, axis=0), dtype=dtype), layout


def prepare_inputs(tp, batch, seq, num_heads):
    """Convert torch-layout params into packed kernel slabs + static metadata.

    All weight composition / scale folding happens here once, in f32:
      * q-scale 1/sqrt(head_dim) folded into Wq / bq,
      * per-input fused QKV projections (cross branches paired),
      * cross-attn out_proj composed into the self-attn QKV projection,
      * self-attn out_proj composed into the first MLP layer,
      * both MLP branches fused (shared layer 1, block-diagonal layer 2),
      * combo_vec's pooling-Q projection fully precomputed,
      * head/batch masking constants for the single-softmax MHA formulation.
    """
    B, S, H = batch, seq, num_heads
    E = int(np.asarray(tp["cross_attn_cand"][2]).shape[0])
    L = int(np.asarray(tp["attn_pooling"][2]).shape[0])
    d, dl = E // H, L // H

    def mha_parts(p, scale):
        in_w, in_b, out_w, out_b = (np.asarray(x, np.float32) for x in p)
        dim = out_w.shape[0]
        return dict(wq=in_w[:dim].T * scale, bq=in_b[:dim] * scale,
                    wk=in_w[dim:2 * dim].T, bk=in_b[dim:2 * dim],
                    wv=in_w[2 * dim:].T, bv=in_b[2 * dim:],
                    wo=out_w.T, bo=out_b)

    cc = mha_parts(tp["cross_attn_cand"], 1.0 / d ** 0.5)
    cq = mha_parts(tp["cross_attn_query"], 1.0 / d ** 0.5)
    sc = mha_parts(tp["self_attn_cand"], 1.0 / d ** 0.5)
    sq = mha_parts(tp["self_attn_query"], 1.0 / d ** 0.5)
    pa = mha_parts(tp["attn_pooling"], 1.0 / dl ** 0.5)

    # fused cross-attn QKV: r1 carries the query-branch Q and cand-branch K/V.
    w_a1 = np.concatenate([cq["wq"], cc["wk"], cc["wv"]], axis=1)     # (E, 3E)
    b_a1 = np.concatenate([cq["bq"], cc["bk"], cc["bv"]])
    w_a2 = np.concatenate([cc["wq"], cq["wk"], cq["wv"]], axis=1)
    b_a2 = np.concatenate([cc["bq"], cq["bk"], cq["bv"]])

    # cross out_proj composed into the self-attn QKV projection.
    def compose(cross, self_):
        wqkv = np.concatenate([self_["wq"], self_["wk"], self_["wv"]], axis=1)
        bqkv = np.concatenate([self_["bq"], self_["bk"], self_["bv"]])
        return cross["wo"] @ wqkv, cross["bo"] @ wqkv + bqkv
    w_b1, b_b1 = compose(cc, sc)
    w_b2, b_b2 = compose(cq, sq)

    # MLP branches: self out_proj folded into layer 1; branches fused.
    (lcw1, lcb1), (lcw2, lcb2) = [(np.asarray(w, np.float32), np.asarray(b, np.float32))
                                  for (w, b) in tp["linear_cand"]]
    (lqw1, lqb1), (lqw2, lqb2) = [(np.asarray(w, np.float32), np.asarray(b, np.float32))
                                  for (w, b) in tp["linear_query"]]
    hid = int(lcw1.shape[0])
    assert lcw1.shape[1] == 2 * E, "cls_dim must equal embed_dim for this model"

    def fold_branch(self_, w1, b1):
        w1t = w1.T                                # (E + cls, hid)
        return self_["wo"] @ w1t[:E], w1t[E:], self_["bo"] @ w1t[:E] + b1
    wc_ctx, wc_cls, bc1 = fold_branch(sc, lcw1, lcb1)
    wq_ctx, wq_cls, bq1 = fold_branch(sq, lqw1, lqb1)
    w1_ctx = np.concatenate([wc_ctx, wq_ctx], axis=1)                 # (E, 2*hid)
    w1_cls = np.concatenate([wc_cls, wq_cls], axis=1)                 # (E, 2*hid)
    b1_both = np.concatenate([bc1, bq1])                              # (2*hid,)
    w2_bd = np.zeros((2 * hid, 2 * L), np.float32)                    # block-diagonal layer 2
    w2_bd[:hid, :L] = lcw2.T
    w2_bd[hid:, L:] = lqw2.T
    b2_both = np.concatenate([lcb2, lqb2])                            # (2L,)

    # pooling: Q(combo_vec) precomputed; fused K/V projection.  Padded batch
    # rows of the torch code never influence the first B outputs, so slicing
    # combo_vec to the runtime batch is equivalent.
    combo = np.asarray(tp["combo_vec"], np.float32)
    assert B <= combo.shape[1], "runtime batch exceeds preallocated combo_vec"
    q_pool = combo[0, :B, :] @ pa["wq"] + pa["bq"]                    # (B, L), scale folded in
    w_pool_kv = np.concatenate([pa["wk"], pa["wv"]], axis=1)          # (L, 2L)
    b_pool_kv = np.concatenate([pa["bk"], pa["bv"]])

    # masking constants for the single-softmax MHA formulation.
    def mha_consts(nk, kv_batch, dim, dh):
        rows = H * nk
        head_r = np.arange(rows) // nk
        head_c = np.arange(dim) // dh
        head_mask = (head_r[:, None] == head_c[None, :]).astype(np.float32)
        batch_c = kv_batch[np.arange(rows) % nk]
        ones_blk = ((head_r[:, None] == head_r[None, :]) &
                    (batch_c[:, None] == batch_c[None, :])).astype(np.float32)
        return head_mask, ones_blk, batch_c

    kv_batch_seq = np.arange(B * S) // S                              # cross & self kv rows
    hm8, ones8, col_b8 = mha_consts(B * S, kv_batch_seq, E, d)
    bias_cross = np.where(kv_batch_seq[:, None] == col_b8[None, :], 0.0, -1e30).astype(np.float32)
    bias_self = np.where(np.arange(B)[:, None] == col_b8[None, :], 0.0, -1e30).astype(np.float32)

    kv_batch_pool = np.arange(5 * B) % B                              # pool kv rows: type-major
    hmp, onesp, col_bp = mha_consts(5 * B, kv_batch_pool, L, dl)
    bias_pool = np.where(np.arange(B)[:, None] == col_bp[None, :], 0.0, -1e30).astype(np.float32)

    # pack into slabs: 3 bf16 weight slabs + 1 f32 bias/constant slab.
    slab_qkv, lay_qkv = _pack_rows(
        [("w_a1", w_a1), ("w_a2", w_a2), ("w_b1", w_b1), ("w_b2", w_b2)],
        dtype=jnp.bfloat16, align=16)
    slab_hid, lay_hid = _pack_rows(
        [("w1_ctx", w1_ctx), ("w1_cls", w1_cls), ("b1_both", b1_both)],
        dtype=jnp.bfloat16, align=16)
    slab_out, lay_out = _pack_rows(
        [("w2_bd", w2_bd), ("w_pool_kv", w_pool_kv), ("w_pool_out", pa["wo"])],
        dtype=jnp.bfloat16, align=16)
    slab_cst, lay_cst = _pack_rows(
        [("b_a1", b_a1), ("b_a2", b_a2), ("b_b1", b_b1), ("b_b2", b_b2),
         ("b2_both", b2_both), ("b_pool_kv", b_pool_kv), ("b_pool_out", pa["bo"]),
         ("q_pool", q_pool),
         ("head_mask8", hm8), ("ones8", ones8),
         ("bias_cross", bias_cross), ("bias_self", bias_self),
         ("head_mask_pool", hmp), ("ones_pool", onesp), ("bias_pool", bias_pool)],
        dtype=jnp.float32, align=8)

    meta = dict(B=B, S=S, E=E, H=H, L=L, hid=hid,
                lay_qkv=lay_qkv, lay_hid=lay_hid, lay_out=lay_out, lay_cst=lay_cst)
    return (slab_qkv, slab_hid, slab_out, slab_cst), meta


# ----------------------------------------------------------------------------
# Wrapper: one grid-less pallas_call, everything stays in VMEM
# ----------------------------------------------------------------------------

def _cost_estimate(meta, operands):
    B, S, E, L, hid = meta["B"], meta["S"], meta["E"], meta["L"], meta["hid"]
    H = meta["H"]
    BSq, R8, RP = B * S, H * B * S, H * 5 * B
    mms = [
        (BSq, 3 * E, E), (BSq, 3 * E, E),
        (BSq, R8, E), (BSq, R8, R8), (BSq, E, R8),
        (BSq, R8, E), (BSq, R8, R8), (BSq, E, R8),
        (BSq, 3 * E, E), (BSq, 3 * E, E),
        (B, R8, E), (B, R8, R8), (B, E, R8),
        (B, R8, E), (B, R8, R8), (B, E, R8),
        (2 * B, 2 * hid, E), (2 * B, 2 * hid, E), (2 * B, 2 * L, 2 * hid),
        (5 * B, 2 * L, L),
        (B, RP, L), (B, RP, RP), (B, L, RP),
        (B, L, L),
    ]
    flops = sum(2 * m * n * k for m, n, k in mms)
    transcendentals = (2 * BSq * R8 + 2 * B * R8 + B * RP
                       + 2 * B * (2 * hid + 2 * L) + B * L)
    bytes_accessed = sum(int(np.prod(x.shape)) * x.dtype.itemsize for x in operands) + B * L * 4
    return pl.CostEstimate(flops=flops, transcendentals=transcendentals,
                           bytes_accessed=bytes_accessed)


def core_matching_forward(slabs, sentence_rep_1, sentence_rep_2, *, meta):
    B, S, E, L = meta["B"], meta["S"], meta["E"], meta["L"]
    assert sentence_rep_1.shape == (B, S, E) and sentence_rep_2.shape == (B, S, E)

    operands = (sentence_rep_1, sentence_rep_2) + tuple(slabs)
    kern = functools.partial(fused_kernel, meta=meta)
    return pl.pallas_call(
        kern,
        out_shape=jax.ShapeDtypeStruct((B, L), jnp.float32),
        cost_estimate=_cost_estimate(meta, operands),
        compiler_params=pltpu.CompilerParams(vmem_limit_bytes=4 * 1024 * 1024),
    )(*operands)


# ----------------------------------------------------------------------------
# Synthetic torch-layout parameters (deterministic)
# ----------------------------------------------------------------------------

def init_torch_params(key, embed_dim, num_heads, linear_dim, cls_dim, batch_size):
    keys = iter(jax.random.split(key, 32))
    nk = lambda: next(keys)

    def mha_params(dim):
        in_proj_w = jax.random.normal(nk(), (3 * dim, dim), jnp.float32) / jnp.sqrt(dim)
        in_proj_b = 0.02 * jax.random.normal(nk(), (3 * dim,), jnp.float32)
        out_w = jax.random.normal(nk(), (dim, dim), jnp.float32) / jnp.sqrt(dim)
        out_b = 0.02 * jax.random.normal(nk(), (dim,), jnp.float32)
        return (in_proj_w, in_proj_b, out_w, out_b)

    def linear_params(in_dim, out_dim):
        w = jax.random.normal(nk(), (out_dim, in_dim), jnp.float32) / jnp.sqrt(in_dim)
        b = 0.02 * jax.random.normal(nk(), (out_dim,), jnp.float32)
        return (w, b)

    return {
        "cross_attn_cand": mha_params(embed_dim),
        "cross_attn_query": mha_params(embed_dim),
        "self_attn_cand": mha_params(embed_dim),
        "self_attn_query": mha_params(embed_dim),
        "attn_pooling": mha_params(linear_dim),
        "linear_cand": (linear_params(embed_dim + cls_dim, 256),
                        linear_params(256, linear_dim)),
        "linear_query": (linear_params(embed_dim + cls_dim, 256),
                         linear_params(256, linear_dim)),
        # xavier_normal-style scale for (1, batch_size, linear_dim)
        "combo_vec": jax.random.normal(nk(), (1, batch_size, linear_dim), jnp.float32)
        * (2.0 / (batch_size + linear_dim)) ** 0.5,
    }


# ----------------------------------------------------------------------------
# Demo
# ----------------------------------------------------------------------------

if __name__ == "__main__":
    # cls_dim must equal embed_dim for the module's concat to be shape-consistent.
    EMBED_DIM, NUM_HEADS, LINEAR_DIM, CLS_DIM = 32, 4, 32, 32
    BATCH, SEQ = 4, 8

    key = jax.random.PRNGKey(0)
    k1, k2, kp = jax.random.split(key, 3)
    sentence_rep_1 = jax.random.normal(k1, (BATCH, SEQ, EMBED_DIM), jnp.float32)
    sentence_rep_2 = jax.random.normal(k2, (BATCH, SEQ, EMBED_DIM), jnp.float32)

    torch_params = init_torch_params(kp, EMBED_DIM, NUM_HEADS, LINEAR_DIM, CLS_DIM, BATCH)
    slabs, meta = prepare_inputs(torch_params, BATCH, SEQ, NUM_HEADS)

    fwd = jax.jit(functools.partial(core_matching_forward, meta=meta))
    out = jax.block_until_ready(fwd(slabs, sentence_rep_1, sentence_rep_2))

    assert out.shape == (BATCH, LINEAR_DIM)
    assert bool(jnp.all(jnp.isfinite(out)))
    # output rows are a softmax over features -> must sum to 1
    assert bool(jnp.allclose(jnp.sum(out, axis=1), 1.0, atol=1e-4))
    print("KERNEL_OK")
</pallas_src>

<mosaic_0001>
module attributes {stable_mosaic.version = 11 : i64} {
  func.func @fused_kernel(%arg0: memref<4x8x32xf32, #tpu.memory_space<vmem>>, %arg1: memref<4x8x32xf32, #tpu.memory_space<vmem>>, %arg2: memref<128x96xbf16, #tpu.memory_space<vmem>>, %arg3: memref<80x512xbf16, #tpu.memory_space<vmem>>, %arg4: memref<576x64xbf16, #tpu.memory_space<vmem>>, %arg5: memref<528x128xf32, #tpu.memory_space<vmem>>, %arg6: memref<4x32xf32, #tpu.memory_space<vmem>>) attributes {dimension_semantics = [], scalar_prefetch = 0 : i64, scratch_operands = 0 : i64, tpu.core_type = #tpu.core_type<tc>} {
    %c0 = arith.constant 0 : index
    %c0_0 = arith.constant 0 : index
    %c0_1 = arith.constant 0 : index
    %0 = vector.load %arg0[%c0, %c0_0, %c0_1] : memref<4x8x32xf32, #tpu.memory_space<vmem>>, vector<4x8x32xf32>
    %c0_2 = arith.constant 0 : index
    %c0_3 = arith.constant 0 : index
    %c0_4 = arith.constant 0 : index
    %1 = vector.load %arg1[%c0_2, %c0_3, %c0_4] : memref<4x8x32xf32, #tpu.memory_space<vmem>>, vector<4x8x32xf32>
    %2 = vector.shape_cast %0 : vector<4x8x32xf32> to vector<32x32xf32>
    %3 = vector.shape_cast %1 : vector<4x8x32xf32> to vector<32x32xf32>
    %c64 = arith.constant 64 : index
    %c0_5 = arith.constant 0 : index
    %4 = vector.load %arg5[%c64, %c0_5] : memref<528x128xf32, #tpu.memory_space<vmem>>, vector<128x32xf32>
    %c192 = arith.constant 192 : index
    %c0_6 = arith.constant 0 : index
    %5 = vector.load %arg5[%c192, %c0_6] : memref<528x128xf32, #tpu.memory_space<vmem>>, vector<128x128xf32>
    %c320 = arith.constant 320 : index
    %c0_7 = arith.constant 0 : index
    %6 = vector.load %arg5[%c320, %c0_7] : memref<528x128xf32, #tpu.memory_space<vmem>>, vector<32x128xf32>
    %c352 = arith.constant 352 : index
    %c0_8 = arith.constant 0 : index
    %7 = vector.load %arg5[%c352, %c0_8] : memref<528x128xf32, #tpu.memory_space<vmem>>, vector<4x128xf32>
    %c360 = arith.constant 360 : index
    %c0_9 = arith.constant 0 : index
    %8 = vector.load %arg5[%c360, %c0_9] : memref<528x128xf32, #tpu.memory_space<vmem>>, vector<80x32xf32>
    %c440 = arith.constant 440 : index
    %c0_10 = arith.constant 0 : index
    %9 = vector.load %arg5[%c440, %c0_10] : memref<528x128xf32, #tpu.memory_space<vmem>>, vector<80x80xf32>
    %c520 = arith.constant 520 : index
    %c0_11 = arith.constant 0 : index
    %10 = vector.load %arg5[%c520, %c0_11] : memref<528x128xf32, #tpu.memory_space<vmem>>, vector<4x80xf32>
    %11 = arith.truncf %2 : vector<32x32xf32> to vector<32x32xbf16>
    %c0_12 = arith.constant 0 : index
    %c0_13 = arith.constant 0 : index
    %12 = vector.load %arg2[%c0_12, %c0_13] : memref<128x96xbf16, #tpu.memory_space<vmem>>, vector<32x96xbf16>
    %cst = arith.constant dense<0.000000e+00> : vector<32x96xf32>
    %13 = tpu.matmul %11, %12, %cst {dimension_numbers = #tpu.dot_dimension_numbers<[1], [0], [0], [1], [0, 0, 1, 1], [], []>} : vector<32x32xbf16>, vector<32x96xbf16>, vector<32x96xf32> -> vector<32x96xf32>
    %c0_14 = arith.constant 0 : index
    %c0_15 = arith.constant 0 : index
    %14 = vector.load %arg5[%c0_14, %c0_15] : memref<528x128xf32, #tpu.memory_space<vmem>>, vector<1x96xf32>
    %15 = vector.broadcast %14 : vector<1x96xf32> to vector<32x96xf32>
    %16 = arith.addf %13, %15 : vector<32x96xf32>
    %17 = arith.truncf %3 : vector<32x32xf32> to vector<32x32xbf16>
    %c32 = arith.constant 32 : index
    %c0_16 = arith.constant 0 : index
    %18 = vector.load %arg2[%c32, %c0_16] : memref<128x96xbf16, #tpu.memory_space<vmem>>, vector<32x96xbf16>
    %cst_17 = arith.constant dense<0.000000e+00> : vector<32x96xf32>
    %19 = tpu.matmul %17, %18, %cst_17 {dimension_numbers = #tpu.dot_dimension_numbers<[1], [0], [0], [1], [0, 0, 1, 1], [], []>} : vector<32x32xbf16>, vector<32x96xbf16>, vector<32x96xf32> -> vector<32x96xf32>
    %c8 = arith.constant 8 : index
    %c0_18 = arith.constant 0 : index
    %20 = vector.load %arg5[%c8, %c0_18] : memref<528x128xf32, #tpu.memory_space<vmem>>, vector<1x96xf32>
    %21 = vector.broadcast %20 : vector<1x96xf32> to vector<32x96xf32>
    %22 = arith.addf %19, %21 : vector<32x96xf32>
    %23 = vector.extract_strided_slice %16 {offsets = [0, 0], sizes = [32, 32], strides = [1, 1]} : vector<32x96xf32> to vector<32x32xf32>
    %24 = vector.extract_strided_slice %16 {offsets = [0, 32], sizes = [32, 32], strides = [1, 1]} : vector<32x96xf32> to vector<32x32xf32>
    %25 = vector.extract_strided_slice %16 {offsets = [0, 64], sizes = [32, 32], strides = [1, 1]} : vector<32x96xf32> to vector<32x32xf32>
    %26 = vector.extract_strided_slice %22 {offsets = [0, 0], sizes = [32, 32], strides = [1, 1]} : vector<32x96xf32> to vector<32x32xf32>
    %27 = vector.extract_strided_slice %22 {offsets = [0, 32], sizes = [32, 32], strides = [1, 1]} : vector<32x96xf32> to vector<32x32xf32>
    %28 = vector.extract_strided_slice %22 {offsets = [0, 64], sizes = [32, 32], strides = [1, 1]} : vector<32x96xf32> to vector<32x32xf32>
    %29 = tpu.concatenate %24, %24, %24, %24 in 0 : vector<32x32xf32>, vector<32x32xf32>, vector<32x32xf32>, vector<32x32xf32> -> vector<128x32xf32>
    %30 = arith.mulf %29, %4 : vector<128x32xf32>
    %31 = arith.truncf %30 : vector<128x32xf32> to vector<128x32xbf16>
    %32 = tpu.concatenate %25, %25, %25, %25 in 0 : vector<32x32xf32>, vector<32x32xf32>, vector<32x32xf32>, vector<32x32xf32> -> vector<128x32xf32>
    %33 = arith.mulf %32, %4 : vector<128x32xf32>
    %34 = arith.truncf %33 : vector<128x32xf32> to vector<128x32xbf16>
    %35 = arith.truncf %26 : vector<32x32xf32> to vector<32x32xbf16>
    %cst_19 = arith.constant dense<0.000000e+00> : vector<32x128xf32>
    %36 = tpu.matmul %35, %31, %cst_19 {dimension_numbers = #tpu.dot_dimension_numbers<[1], [1], [0], [0], [0, 0, 1, 0], [], []>} : vector<32x32xbf16>, vector<128x32xbf16>, vector<32x128xf32> -> vector<32x128xf32>
    %37 = arith.addf %36, %6 : vector<32x128xf32>
    %cst_20 = arith.constant dense<0xFF800000> : vector<32xf32>
    %38 = vector.multi_reduction <maximumf>, %37, %cst_20 [1] : vector<32x128xf32> to vector<32xf32>
    %39 = vector.shape_cast %38 : vector<32xf32> to vector<32x1xf32>
    %40 = vector.broadcast %39 : vector<32x1xf32> to vector<32x128xf32>
    %41 = arith.subf %37, %40 : vector<32x128xf32>
    %42 = math.exp %41 : vector<32x128xf32>
    %cst_21 = arith.constant dense<0.000000e+00> : vector<32x128xf32>
    %43 = tpu.matmul %42, %5, %cst_21 {dimension_numbers = #tpu.dot_dimension_numbers<[1], [0], [0], [1], [0, 0, 1, 1], [], []>} : vector<32x128xf32>, vector<128x128xf32>, vector<32x128xf32> -> vector<32x128xf32>
    %cst_22 = arith.constant 1.000000e-30 : f32
    %44 = vector.broadcast %cst_22 : f32 to vector<32x128xf32>
    %45 = arith.addf %43, %44 : vector<32x128xf32>
    %46 = arith.divf %42, %45 : vector<32x128xf32>
    %47 = arith.truncf %46 : vector<32x128xf32> to vector<32x128xbf16>
    %cst_23 = arith.constant dense<0.000000e+00> : vector<32x32xf32>
    %48 = tpu.matmul %47, %34, %cst_23 {dimension_numbers = #tpu.dot_dimension_numbers<[1], [0], [0], [1], [0, 0, 1, 1], [], []>} : vector<32x128xbf16>, vector<128x32xbf16>, vector<32x32xf32> -> vector<32x32xf32>
    %49 = tpu.concatenate %27, %27, %27, %27 in 0 : vector<32x32xf32>, vector<32x32xf32>, vector<32x32xf32>, vector<32x32xf32> -> vector<128x32xf32>
    %50 = arith.mulf %49, %4 : vector<128x32xf32>
    %51 = arith.truncf %50 : vector<128x32xf32> to vector<128x32xbf16>
    %52 = tpu.concatenate %28, %28, %28, %28 in 0 : vector<32x32xf32>, vector<32x32xf32>, vector<32x32xf32>, vector<32x32xf32> -> vector<128x32xf32>
    %53 = arith.mulf %52, %4 : vector<128x32xf32>
    %54 = arith.truncf %53 : vector<128x32xf32> to vector<128x32xbf16>
    %55 = arith.truncf %23 : vector<32x32xf32> to vector<32x32xbf16>
    %cst_24 = arith.constant dense<0.000000e+00> : vector<32x128xf32>
    %56 = tpu.matmul %55, %51, %cst_24 {dimension_numbers = #tpu.dot_dimension_numbers<[1], [1], [0], [0], [0, 0, 1, 0], [], []>} : vector<32x32xbf16>, vector<128x32xbf16>, vector<32x128xf32> -> vector<32x128xf32>
    %57 = arith.addf %56, %6 : vector<32x128xf32>
    %cst_25 = arith.constant dense<0xFF800000> : vector<32xf32>
    %58 = vector.multi_reduction <maximumf>, %57, %cst_25 [1] : vector<32x128xf32> to vector<32xf32>
    %59 = vector.shape_cast %58 : vector<32xf32> to vector<32x1xf32>
    %60 = vector.broadcast %59 : vector<32x1xf32> to vector<32x128xf32>
    %61 = arith.subf %57, %60 : vector<32x128xf32>
    %62 = math.exp %61 : vector<32x128xf32>
    %cst_26 = arith.constant dense<0.000000e+00> : vector<32x128xf32>
    %63 = tpu.matmul %62, %5, %cst_26 {dimension_numbers = #tpu.dot_dimension_numbers<[1], [0], [0], [1], [0, 0, 1, 1], [], []>} : vector<32x128xf32>, vector<128x128xf32>, vector<32x128xf32> -> vector<32x128xf32>
    %cst_27 = arith.constant 1.000000e-30 : f32
    %64 = vector.broadcast %cst_27 : f32 to vector<32x128xf32>
    %65 = arith.addf %63, %64 : vector<32x128xf32>
    %66 = arith.divf %62, %65 : vector<32x128xf32>
    %67 = arith.truncf %66 : vector<32x128xf32> to vector<32x128xbf16>
    %cst_28 = arith.constant dense<0.000000e+00> : vector<32x32xf32>
    %68 = tpu.matmul %67, %54, %cst_28 {dimension_numbers = #tpu.dot_dimension_numbers<[1], [0], [0], [1], [0, 0, 1, 1], [], []>} : vector<32x128xbf16>, vector<128x32xbf16>, vector<32x32xf32> -> vector<32x32xf32>
    %69 = arith.truncf %48 : vector<32x32xf32> to vector<32x32xbf16>
    %c64_29 = arith.constant 64 : index
    %c0_30 = arith.constant 0 : index
    %70 = vector.load %arg2[%c64_29, %c0_30] : memref<128x96xbf16, #tpu.memory_space<vmem>>, vector<32x96xbf16>
    %cst_31 = arith.constant dense<0.000000e+00> : vector<32x96xf32>
    %71 = tpu.matmul %69, %70, %cst_31 {dimension_numbers = #tpu.dot_dimension_numbers<[1], [0], [0], [1], [0, 0, 1, 1], [], []>} : vector<32x32xbf16>, vector<32x96xbf16>, vector<32x96xf32> -> vector<32x96xf32>
    %c16 = arith.constant 16 : index
    %c0_32 = arith.constant 0 : index
    %72 = vector.load %arg5[%c16, %c0_32] : memref<528x128xf32, #tpu.memory_space<vmem>>, vector<1x96xf32>
    %73 = vector.broadcast %72 : vector<1x96xf32> to vector<32x96xf32>
    %74 = arith.addf %71, %73 : vector<32x96xf32>
    %75 = arith.truncf %68 : vector<32x32xf32> to vector<32x32xbf16>
    %c96 = arith.constant 96 : index
    %c0_33 = arith.constant 0 : index
    %76 = vector.load %arg2[%c96, %c0_33] : memref<128x96xbf16, #tpu.memory_space<vmem>>, vector<32x96xbf16>
    %cst_34 = arith.constant dense<0.000000e+00> : vector<32x96xf32>
    %77 = tpu.matmul %75, %76, %cst_34 {dimension_numbers = #tpu.dot_dimension_numbers<[1], [0], [0], [1], [0, 0, 1, 1], [], []>} : vector<32x32xbf16>, vector<32x96xbf16>, vector<32x96xf32> -> vector<32x96xf32>
    %c24 = arith.constant 24 : index
    %c0_35 = arith.constant 0 : index
    %78 = vector.load %arg5[%c24, %c0_35] : memref<528x128xf32, #tpu.memory_space<vmem>>, vector<1x96xf32>
    %79 = vector.broadcast %78 : vector<1x96xf32> to vector<32x96xf32>
    %80 = arith.addf %77, %79 : vector<32x96xf32>
    %81 = vector.shape_cast %74 : vector<32x96xf32> to vector<4x8x96xf32>
    %82 = vector.extract_strided_slice %81 {offsets = [0, 0, 0], sizes = [4, 1, 32], strides = [1, 1, 1]} : vector<4x8x96xf32> to vector<4x1x32xf32>
    %83 = vector.shape_cast %82 : vector<4x1x32xf32> to vector<4x32xf32>
    %84 = vector.shape_cast %80 : vector<32x96xf32> to vector<4x8x96xf32>
    %85 = vector.extract_strided_slice %84 {offsets = [0, 0, 0], sizes = [4, 1, 32], strides = [1, 1, 1]} : vector<4x8x96xf32> to vector<4x1x32xf32>
    %86 = vector.shape_cast %85 : vector<4x1x32xf32> to vector<4x32xf32>
    %87 = vector.extract_strided_slice %74 {offsets = [0, 32], sizes = [32, 32], strides = [1, 1]} : vector<32x96xf32> to vector<32x32xf32>
    %88 = vector.extract_strided_slice %74 {offsets = [0, 64], sizes = [32, 32], strides = [1, 1]} : vector<32x96xf32> to vector<32x32xf32>
    %89 = tpu.concatenate %87, %87, %87, %87 in 0 : vector<32x32xf32>, vector<32x32xf32>, vector<32x32xf32>, vector<32x32xf32> -> vector<128x32xf32>
    %90 = arith.mulf %89, %4 : vector<128x32xf32>
    %91 = arith.truncf %90 : vector<128x32xf32> to vector<128x32xbf16>
    %92 = tpu.concatenate %88, %88, %88, %88 in 0 : vector<32x32xf32>, vector<32x32xf32>, vector<32x32xf32>, vector<32x32xf32> -> vector<128x32xf32>
    %93 = arith.mulf %92, %4 : vector<128x32xf32>
    %94 = arith.truncf %93 : vector<128x32xf32> to vector<128x32xbf16>
    %95 = arith.truncf %83 : vector<4x32xf32> to vector<4x32xbf16>
    %cst_36 = arith.constant dense<0.000000e+00> : vector<4x128xf32>
    %96 = tpu.matmul %95, %91, %cst_36 {dimension_numbers = #tpu.dot_dimension_numbers<[1], [1], [0], [0], [0, 0, 1, 0], [], []>} : vector<4x32xbf16>, vector<128x32xbf16>, vector<4x128xf32> -> vector<4x128xf32>
    %97 = arith.addf %96, %7 : vector<4x128xf32>
    %cst_37 = arith.constant dense<0xFF800000> : vector<4xf32>
    %98 = vector.multi_reduction <maximumf>, %97, %cst_37 [1] : vector<4x128xf32> to vector<4xf32>
    %99 = vector.shape_cast %98 : vector<4xf32> to vector<4x1xf32>
    %100 = vector.broadcast %99 : vector<4x1xf32> to vector<4x128xf32>
    %101 = arith.subf %97, %100 : vector<4x128xf32>
    %102 = math.exp %101 : vector<4x128xf32>
    %cst_38 = arith.constant dense<0.000000e+00> : vector<4x128xf32>
    %103 = tpu.matmul %102, %5, %cst_38 {dimension_numbers = #tpu.dot_dimension_numbers<[1], [0], [0], [1], [0, 0, 1, 1], [], []>} : vector<4x128xf32>, vector<128x128xf32>, vector<4x128xf32> -> vector<4x128xf32>
    %cst_39 = arith.constant 1.000000e-30 : f32
    %104 = vector.broadcast %cst_39 : f32 to vector<4x128xf32>
    %105 = arith.addf %103, %104 : vector<4x128xf32>
    %106 = arith.divf %102, %105 : vector<4x128xf32>
    %107 = arith.truncf %106 : vector<4x128xf32> to vector<4x128xbf16>
    %cst_40 = arith.constant dense<0.000000e+00> : vector<4x32xf32>
    %108 = tpu.matmul %107, %94, %cst_40 {dimension_numbers = #tpu.dot_dimension_numbers<[1], [0], [0], [1], [0, 0, 1, 1], [], []>} : vector<4x128xbf16>, vector<128x32xbf16>, vector<4x32xf32> -> vector<4x32xf32>
    %109 = vector.extract_strided_slice %80 {offsets = [0, 32], sizes = [32, 32], strides = [1, 1]} : vector<32x96xf32> to vector<32x32xf32>
    %110 = vector.extract_strided_slice %80 {offsets = [0, 64], sizes = [32, 32], strides = [1, 1]} : vector<32x96xf32> to vector<32x32xf32>
    %111 = tpu.concatenate %109, %109, %109, %109 in 0 : vector<32x32xf32>, vector<32x32xf32>, vector<32x32xf32>, vector<32x32xf32> -> vector<128x32xf32>
    %112 = arith.mulf %111, %4 : vector<128x32xf32>
    %113 = arith.truncf %112 : vector<128x32xf32> to vector<128x32xbf16>
    %114 = tpu.concatenate %110, %110, %110, %110 in 0 : vector<32x32xf32>, vector<32x32xf32>, vector<32x32xf32>, vector<32x32xf32> -> vector<128x32xf32>
    %115 = arith.mulf %114, %4 : vector<128x32xf32>
    %116 = arith.truncf %115 : vector<128x32xf32> to vector<128x32xbf16>
    %117 = arith.truncf %86 : vector<4x32xf32> to vector<4x32xbf16>
    %cst_41 = arith.constant dense<0.000000e+00> : vector<4x128xf32>
    %118 = tpu.matmul %117, %113, %cst_41 {dimension_numbers = #tpu.dot_dimension_numbers<[1], [1], [0], [0], [0, 0, 1, 0], [], []>} : vector<4x32xbf16>, vector<128x32xbf16>, vector<4x128xf32> -> vector<4x128xf32>
    %119 = arith.addf %118, %7 : vector<4x128xf32>
    %cst_42 = arith.constant dense<0xFF800000> : vector<4xf32>
    %120 = vector.multi_reduction <maximumf>, %119, %cst_42 [1] : vector<4x128xf32> to vector<4xf32>
    %121 = vector.shape_cast %120 : vector<4xf32> to vector<4x1xf32>
    %122 = vector.broadcast %121 : vector<4x1xf32> to vector<4x128xf32>
    %123 = arith.subf %119, %122 : vector<4x128xf32>
    %124 = math.exp %123 : vector<4x128xf32>
    %cst_43 = arith.constant dense<0.000000e+00> : vector<4x128xf32>
    %125 = tpu.matmul %124, %5, %cst_43 {dimension_numbers = #tpu.dot_dimension_numbers<[1], [0], [0], [1], [0, 0, 1, 1], [], []>} : vector<4x128xf32>, vector<128x128xf32>, vector<4x128xf32> -> vector<4x128xf32>
    %cst_44 = arith.constant 1.000000e-30 : f32
    %126 = vector.broadcast %cst_44 : f32 to vector<4x128xf32>
    %127 = arith.addf %125, %126 : vector<4x128xf32>
    %128 = arith.divf %124, %127 : vector<4x128xf32>
    %129 = arith.truncf %128 : vector<4x128xf32> to vector<4x128xbf16>
    %cst_45 = arith.constant dense<0.000000e+00> : vector<4x32xf32>
    %130 = tpu.matmul %129, %116, %cst_45 {dimension_numbers = #tpu.dot_dimension_numbers<[1], [0], [0], [1], [0, 0, 1, 1], [], []>} : vector<4x128xbf16>, vector<128x32xbf16>, vector<4x32xf32> -> vector<4x32xf32>
    %131 = tpu.concatenate %108, %130 in 0 : vector<4x32xf32>, vector<4x32xf32> -> vector<8x32xf32>
    %132 = vector.extract_strided_slice %0 {offsets = [0, 0, 0], sizes = [4, 1, 32], strides = [1, 1, 1]} : vector<4x8x32xf32> to vector<4x1x32xf32>
    %133 = vector.shape_cast %132 : vector<4x1x32xf32> to vector<4x32xf32>
    %134 = vector.extract_strided_slice %1 {offsets = [0, 0, 0], sizes = [4, 1, 32], strides = [1, 1, 1]} : vector<4x8x32xf32> to vector<4x1x32xf32>
    %135 = vector.shape_cast %134 : vector<4x1x32xf32> to vector<4x32xf32>
    %136 = tpu.concatenate %133, %135 in 0 : vector<4x32xf32>, vector<4x32xf32> -> vector<8x32xf32>
    %c64_46 = arith.constant 64 : index
    %c0_47 = arith.constant 0 : index
    %137 = vector.load %arg3[%c64_46, %c0_47] : memref<80x512xbf16, #tpu.memory_space<vmem>>, vector<1x512xbf16>
    %138 = arith.extf %137 : vector<1x512xbf16> to vector<1x512xf32>
    %139 = arith.truncf %131 : vector<8x32xf32> to vector<8x32xbf16>
    %c0_48 = arith.constant 0 : index
    %c0_49 = arith.constant 0 : index
    %140 = vector.load %arg3[%c0_48, %c0_49] : memref<80x512xbf16, #tpu.memory_space<vmem>>, vector<32x512xbf16>
    %cst_50 = arith.constant dense<0.000000e+00> : vector<8x512xf32>
    %141 = tpu.matmul %139, %140, %cst_50 {dimension_numbers = #tpu.dot_dimension_numbers<[1], [0], [0], [1], [0, 0, 1, 1], [], []>} : vector<8x32xbf16>, vector<32x512xbf16>, vector<8x512xf32> -> vector<8x512xf32>
    %142 = arith.truncf %136 : vector<8x32xf32> to vector<8x32xbf16>
    %c32_51 = arith.constant 32 : index
    %c0_52 = arith.constant 0 : index
    %143 = vector.load %arg3[%c32_51, %c0_52] : memref<80x512xbf16, #tpu.memory_space<vmem>>, vector<32x512xbf16>
    %cst_53 = arith.constant dense<0.000000e+00> : vector<8x512xf32>
    %144 = tpu.matmul %142, %143, %cst_53 {dimension_numbers = #tpu.dot_dimension_numbers<[1], [0], [0], [1], [0, 0, 1, 1], [], []>} : vector<8x32xbf16>, vector<32x512xbf16>, vector<8x512xf32> -> vector<8x512xf32>
    %145 = arith.addf %141, %144 : vector<8x512xf32>
    %146 = vector.broadcast %138 : vector<1x512xf32> to vector<8x512xf32>
    %147 = arith.addf %145, %146 : vector<8x512xf32>
    %cst_54 = arith.constant 5.000000e-01 : f32
    %148 = vector.broadcast %cst_54 : f32 to vector<8x512xf32>
    %149 = arith.mulf %148, %147 : vector<8x512xf32>
    %cst_55 = arith.constant 0.707106769 : f32
    %150 = vector.broadcast %cst_55 : f32 to vector<8x512xf32>
    %151 = arith.mulf %147, %150 : vector<8x512xf32>
    %cst_56 = arith.constant 0.000000e+00 : f32
    %152 = vector.broadcast %cst_56 : f32 to vector<8x512xf32>
    %153 = arith.cmpf olt, %151, %152 : vector<8x512xf32>
    %cst_57 = arith.constant -1.000000e+00 : f32
    %cst_58 = arith.constant 1.000000e+00 : f32
    %154 = vector.broadcast %cst_57 : f32 to vector<8x512xf32>
    %155 = vector.broadcast %cst_58 : f32 to vector<8x512xf32>
    %156 = arith.select %153, %154, %155 : vector<8x512xi1>, vector<8x512xf32>
    %157 = math.absf %151 : vector<8x512xf32>
    %cst_59 = arith.constant 0.327591091 : f32
    %158 = vector.broadcast %cst_59 : f32 to vector<8x512xf32>
    %159 = arith.mulf %158, %157 : vector<8x512xf32>
    %cst_60 = arith.constant 1.000000e+00 : f32
    %160 = vector.broadcast %cst_60 : f32 to vector<8x512xf32>
    %161 = arith.addf %160, %159 : vector<8x512xf32>
    %cst_61 = arith.constant 1.000000e+00 : f32
    %162 = vector.broadcast %cst_61 : f32 to vector<8x512xf32>
    %163 = arith.divf %162, %161 : vector<8x512xf32>
    %cst_62 = arith.constant 1.06140542 : f32
    %164 = vector.broadcast %cst_62 : f32 to vector<8x512xf32>
    %165 = arith.mulf %163, %164 : vector<8x512xf32>
    %cst_63 = arith.constant -1.45315206 : f32
    %166 = vector.broadcast %cst_63 : f32 to vector<8x512xf32>
    %167 = arith.addf %166, %165 : vector<8x512xf32>
    %168 = arith.mulf %163, %167 : vector<8x512xf32>
    %cst_64 = arith.constant 1.42141378 : f32
    %169 = vector.broadcast %cst_64 : f32 to vector<8x512xf32>
    %170 = arith.addf %169, %168 : vector<8x512xf32>
    %171 = arith.mulf %163, %170 : vector<8x512xf32>
    %cst_65 = arith.constant -0.284496725 : f32
    %172 = vector.broadcast %cst_65 : f32 to vector<8x512xf32>
    %173 = arith.addf %172, %171 : vector<8x512xf32>
    %174 = arith.mulf %163, %173 : vector<8x512xf32>
    %cst_66 = arith.constant 0.254829586 : f32
    %175 = vector.broadcast %cst_66 : f32 to vector<8x512xf32>
    %176 = arith.addf %175, %174 : vector<8x512xf32>
    %177 = arith.mulf %163, %176 : vector<8x512xf32>
    %cst_67 = arith.constant 0.000000e+00 : f32
    %178 = vector.broadcast %cst_67 : f32 to vector<8x512xf32>
    %179 = arith.subf %178, %157 : vector<8x512xf32>
    %180 = arith.mulf %179, %157 : vector<8x512xf32>
    %181 = math.exp %180 : vector<8x512xf32>
    %182 = arith.mulf %177, %181 : vector<8x512xf32>
    %cst_68 = arith.constant 1.000000e+00 : f32
    %183 = vector.broadcast %cst_68 : f32 to vector<8x512xf32>
    %184 = arith.subf %183, %182 : vector<8x512xf32>
    %185 = arith.mulf %156, %184 : vector<8x512xf32>
    %cst_69 = arith.constant 1.000000e+00 : f32
    %186 = vector.broadcast %cst_69 : f32 to vector<8x512xf32>
    %187 = arith.addf %186, %185 : vector<8x512xf32>
    %188 = arith.mulf %149, %187 : vector<8x512xf32>
    %189 = arith.truncf %188 : vector<8x512xf32> to vector<8x512xbf16>
    %c0_70 = arith.constant 0 : index
    %c0_71 = arith.constant 0 : index
    %190 = vector.load %arg4[%c0_70, %c0_71] : memref<576x64xbf16, #tpu.memory_space<vmem>>, vector<512x64xbf16>
    %cst_72 = arith.constant dense<0.000000e+00> : vector<8x64xf32>
    %191 = tpu.matmul %189, %190, %cst_72 {dimension_numbers = #tpu.dot_dimension_numbers<[1], [0], [0], [1], [0, 0, 1, 1], [], []>} : vector<8x512xbf16>, vector<512x64xbf16>, vector<8x64xf32> -> vector<8x64xf32>
    %c32_73 = arith.constant 32 : index
    %c0_74 = arith.constant 0 : index
    %192 = vector.load %arg5[%c32_73, %c0_74] : memref<528x128xf32, #tpu.memory_space<vmem>>, vector<1x64xf32>
    %193 = vector.broadcast %192 : vector<1x64xf32> to vector<8x64xf32>
    %194 = arith.addf %191, %193 : vector<8x64xf32>
    %cst_75 = arith.constant 5.000000e-01 : f32
    %195 = vector.broadcast %cst_75 : f32 to vector<8x64xf32>
    %196 = arith.mulf %195, %194 : vector<8x64xf32>
    %cst_76 = arith.constant 0.707106769 : f32
    %197 = vector.broadcast %cst_76 : f32 to vector<8x64xf32>
    %198 = arith.mulf %194, %197 : vector<8x64xf32>
    %cst_77 = arith.constant 0.000000e+00 : f32
    %199 = vector.broadcast %cst_77 : f32 to vector<8x64xf32>
    %200 = arith.cmpf olt, %198, %199 : vector<8x64xf32>
    %cst_78 = arith.constant -1.000000e+00 : f32
    %cst_79 = arith.constant 1.000000e+00 : f32
    %201 = vector.broadcast %cst_78 : f32 to vector<8x64xf32>
    %202 = vector.broadcast %cst_79 : f32 to vector<8x64xf32>
    %203 = arith.select %200, %201, %202 : vector<8x64xi1>, vector<8x64xf32>
    %204 = math.absf %198 : vector<8x64xf32>
    %cst_80 = arith.constant 0.327591091 : f32
    %205 = vector.broadcast %cst_80 : f32 to vector<8x64xf32>
    %206 = arith.mulf %205, %204 : vector<8x64xf32>
    %cst_81 = arith.constant 1.000000e+00 : f32
    %207 = vector.broadcast %cst_81 : f32 to vector<8x64xf32>
    %208 = arith.addf %207, %206 : vector<8x64xf32>
    %cst_82 = arith.constant 1.000000e+00 : f32
    %209 = vector.broadcast %cst_82 : f32 to vector<8x64xf32>
    %210 = arith.divf %209, %208 : vector<8x64xf32>
    %cst_83 = arith.constant 1.06140542 : f32
    %211 = vector.broadcast %cst_83 : f32 to vector<8x64xf32>
    %212 = arith.mulf %210, %211 : vector<8x64xf32>
    %cst_84 = arith.constant -1.45315206 : f32
    %213 = vector.broadcast %cst_84 : f32 to vector<8x64xf32>
    %214 = arith.addf %213, %212 : vector<8x64xf32>
    %215 = arith.mulf %210, %214 : vector<8x64xf32>
    %cst_85 = arith.constant 1.42141378 : f32
    %216 = vector.broadcast %cst_85 : f32 to vector<8x64xf32>
    %217 = arith.addf %216, %215 : vector<8x64xf32>
    %218 = arith.mulf %210, %217 : vector<8x64xf32>
    %cst_86 = arith.constant -0.284496725 : f32
    %219 = vector.broadcast %cst_86 : f32 to vector<8x64xf32>
    %220 = arith.addf %219, %218 : vector<8x64xf32>
    %221 = arith.mulf %210, %220 : vector<8x64xf32>
    %cst_87 = arith.constant 0.254829586 : f32
    %222 = vector.broadcast %cst_87 : f32 to vector<8x64xf32>
    %223 = arith.addf %222, %221 : vector<8x64xf32>
    %224 = arith.mulf %210, %223 : vector<8x64xf32>
    %cst_88 = arith.constant 0.000000e+00 : f32
    %225 = vector.broadcast %cst_88 : f32 to vector<8x64xf32>
    %226 = arith.subf %225, %204 : vector<8x64xf32>
    %227 = arith.mulf %226, %204 : vector<8x64xf32>
    %228 = math.exp %227 : vector<8x64xf32>
    %229 = arith.mulf %224, %228 : vector<8x64xf32>
    %cst_89 = arith.constant 1.000000e+00 : f32
    %230 = vector.broadcast %cst_89 : f32 to vector<8x64xf32>
    %231 = arith.subf %230, %229 : vector<8x64xf32>
    %232 = arith.mulf %203, %231 : vector<8x64xf32>
    %cst_90 = arith.constant 1.000000e+00 : f32
    %233 = vector.broadcast %cst_90 : f32 to vector<8x64xf32>
    %234 = arith.addf %233, %232 : vector<8x64xf32>
    %235 = arith.mulf %196, %234 : vector<8x64xf32>
    %236 = vector.extract_strided_slice %235 {offsets = [0, 0], sizes = [4, 32], strides = [1, 1]} : vector<8x64xf32> to vector<4x32xf32>
    %237 = vector.extract_strided_slice %235 {offsets = [4, 32], sizes = [4, 32], strides = [1, 1]} : vector<8x64xf32> to vector<4x32xf32>
    %238 = arith.maximumf %236, %237 : vector<4x32xf32>
    %239 = arith.subf %236, %237 : vector<4x32xf32>
    %240 = math.absf %239 : vector<4x32xf32>
    %241 = arith.mulf %236, %237 : vector<4x32xf32>
    %242 = tpu.concatenate %238, %236, %240, %237, %241 in 0 : vector<4x32xf32>, vector<4x32xf32>, vector<4x32xf32>, vector<4x32xf32>, vector<4x32xf32> -> vector<20x32xf32>
    %243 = arith.truncf %242 : vector<20x32xf32> to vector<20x32xbf16>
    %c512 = arith.constant 512 : index
    %c0_91 = arith.constant 0 : index
    %244 = vector.load %arg4[%c512, %c0_91] : memref<576x64xbf16, #tpu.memory_space<vmem>>, vector<32x64xbf16>
    %cst_92 = arith.constant dense<0.000000e+00> : vector<20x64xf32>
    %245 = tpu.matmul %243, %244, %cst_92 {dimension_numbers = #tpu.dot_dimension_numbers<[1], [0], [0], [1], [0, 0, 1, 1], [], []>} : vector<20x32xbf16>, vector<32x64xbf16>, vector<20x64xf32> -> vector<20x64xf32>
    %c40 = arith.constant 40 : index
    %c0_93 = arith.constant 0 : index
    %246 = vector.load %arg5[%c40, %c0_93] : memref<528x128xf32, #tpu.memory_space<vmem>>, vector<1x64xf32>
    %247 = vector.broadcast %246 : vector<1x64xf32> to vector<20x64xf32>
    %248 = arith.addf %245, %247 : vector<20x64xf32>
    %c56 = arith.constant 56 : index
    %c0_94 = arith.constant 0 : index
    %249 = vector.load %arg5[%c56, %c0_94] : memref<528x128xf32, #tpu.memory_space<vmem>>, vector<4x32xf32>
    %250 = vector.extract_strided_slice %248 {offsets = [0, 0], sizes = [20, 32], strides = [1, 1]} : vector<20x64xf32> to vector<20x32xf32>
    %251 = vector.extract_strided_slice %248 {offsets = [0, 32], sizes = [20, 32], strides = [1, 1]} : vector<20x64xf32> to vector<20x32xf32>
    %252 = tpu.concatenate %250, %250, %250, %250 in 0 : vector<20x32xf32>, vector<20x32xf32>, vector<20x32xf32>, vector<20x32xf32> -> vector<80x32xf32>
    %253 = arith.mulf %252, %8 : vector<80x32xf32>
    %254 = arith.truncf %253 : vector<80x32xf32> to vector<80x32xbf16>
    %255 = tpu.concatenate %251, %251, %251, %251 in 0 : vector<20x32xf32>, vector<20x32xf32>, vector<20x32xf32>, vector<20x32xf32> -> vector<80x32xf32>
    %256 = arith.mulf %255, %8 : vector<80x32xf32>
    %257 = arith.truncf %256 : vector<80x32xf32> to vector<80x32xbf16>
    %258 = arith.truncf %249 : vector<4x32xf32> to vector<4x32xbf16>
    %cst_95 = arith.constant dense<0.000000e+00> : vector<4x80xf32>
    %259 = tpu.matmul %258, %254, %cst_95 {dimension_numbers = #tpu.dot_dimension_numbers<[1], [1], [0], [0], [0, 0, 1, 0], [], []>} : vector<4x32xbf16>, vector<80x32xbf16>, vector<4x80xf32> -> vector<4x80xf32>
    %260 = arith.addf %259, %10 : vector<4x80xf32>
    %cst_96 = arith.constant dense<0xFF800000> : vector<4xf32>
    %261 = vector.multi_reduction <maximumf>, %260, %cst_96 [1] : vector<4x80xf32> to vector<4xf32>
    %262 = vector.shape_cast %261 : vector<4xf32> to vector<4x1xf32>
    %263 = vector.broadcast %262 : vector<4x1xf32> to vector<4x80xf32>
    %264 = arith.subf %260, %263 : vector<4x80xf32>
    %265 = math.exp %264 : vector<4x80xf32>
    %cst_97 = arith.constant dense<0.000000e+00> : vector<4x80xf32>
    %266 = tpu.matmul %265, %9, %cst_97 {dimension_numbers = #tpu.dot_dimension_numbers<[1], [0], [0], [1], [0, 0, 1, 1], [], []>} : vector<4x80xf32>, vector<80x80xf32>, vector<4x80xf32> -> vector<4x80xf32>
    %cst_98 = arith.constant 1.000000e-30 : f32
    %267 = vector.broadcast %cst_98 : f32 to vector<4x80xf32>
    %268 = arith.addf %266, %267 : vector<4x80xf32>
    %269 = arith.divf %265, %268 : vector<4x80xf32>
    %270 = arith.truncf %269 : vector<4x80xf32> to vector<4x80xbf16>
    %cst_99 = arith.constant dense<0.000000e+00> : vector<4x32xf32>
    %271 = tpu.matmul %270, %257, %cst_99 {dimension_numbers = #tpu.dot_dimension_numbers<[1], [0], [0], [1], [0, 0, 1, 1], [], []>} : vector<4x80xbf16>, vector<80x32xbf16>, vector<4x32xf32> -> vector<4x32xf32>
    %272 = arith.truncf %271 : vector<4x32xf32> to vector<4x32xbf16>
    %c544 = arith.constant 544 : index
    %c0_100 = arith.constant 0 : index
    %273 = vector.load %arg4[%c544, %c0_100] : memref<576x64xbf16, #tpu.memory_space<vmem>>, vector<32x32xbf16>
    %cst_101 = arith.constant dense<0.000000e+00> : vector<4x32xf32>
    %274 = tpu.matmul %272, %273, %cst_101 {dimension_numbers = #tpu.dot_dimension_numbers<[1], [0], [0], [1], [0, 0, 1, 1], [], []>} : vector<4x32xbf16>, vector<32x32xbf16>, vector<4x32xf32> -> vector<4x32xf32>
    %c48 = arith.constant 48 : index
    %c0_102 = arith.constant 0 : index
    %275 = vector.load %arg5[%c48, %c0_102] : memref<528x128xf32, #tpu.memory_space<vmem>>, vector<1x32xf32>
    %276 = vector.broadcast %275 : vector<1x32xf32> to vector<4x32xf32>
    %277 = arith.addf %274, %276 : vector<4x32xf32>
    %cst_103 = arith.constant dense<0xFF800000> : vector<4xf32>
    %278 = vector.multi_reduction <maximumf>, %277, %cst_103 [1] : vector<4x32xf32> to vector<4xf32>
    %279 = vector.shape_cast %278 : vector<4xf32> to vector<4x1xf32>
    %280 = vector.broadcast %279 : vector<4x1xf32> to vector<4x32xf32>
    %281 = arith.subf %277, %280 : vector<4x32xf32>
    %282 = math.exp %281 : vector<4x32xf32>
    %cst_104 = arith.constant dense<0.000000e+00> : vector<4xf32>
    %283 = vector.multi_reduction <add>, %282, %cst_104 [1] : vector<4x32xf32> to vector<4xf32>
    %284 = vector.shape_cast %283 : vector<4xf32> to vector<4x1xf32>
    %285 = vector.broadcast %284 : vector<4x1xf32> to vector<4x32xf32>
    %286 = arith.divf %282, %285 : vector<4x32xf32>
    %c0_105 = arith.constant 0 : index
    %c0_106 = arith.constant 0 : index
    %287 = vector.load %arg6[%c0_105, %c0_106] : memref<4x32xf32, #tpu.memory_space<vmem>>, vector<4x32xf32>
    tpu.vector_store %arg6[%c0_105, %c0_106], %286 {strides = array<i32>} : memref<4x32xf32, #tpu.memory_space<vmem>>, vector<4x32xf32>,
    return
  }
}

</mosaic_0001>

<llo_original>
// kernel: core_matching_forward.1
$region0: #{core_matching_forward.1}
  #allocation0 [shape = 'u32[]', space=smem, size = 0x4, offset = 0x4, fixed_abs, tag = 'smem constant byte address 0x4 - core index']
  #allocation1 [shape = 'u32[72,128]{1,0:T(1,128)}', space=vmem, size = 0x9000, scoped, tag = 'internal scratch']
  %s0 = inlined_call_operand.vmem [shape: f32[4,8,32], index: 0, kind: input, shape index: {}]
  %s1 = inlined_call_operand.hbm [shape: f32[4,8,32], index: 1, kind: input, shape index: {}]
  %s2 = inlined_call_operand.vmem [shape: bf16[128,96], index: 2, kind: input, shape index: {}]
  %s3 = inlined_call_operand.hbm [shape: bf16[80,512], index: 3, kind: input, shape index: {}]
  %s4 = inlined_call_operand.vmem [shape: bf16[576,64], index: 4, kind: input, shape index: {}]
  %s5 = inlined_call_operand.vmem [shape: f32[528,128], index: 5, kind: input, shape index: {}]
  %s6 = inlined_call_operand.hbm [shape: f32[4,32], index: 6, kind: output, shape index: {}]
  %s7 = sld [smem:[#allocation0]]
  $region42: #{core_matching_forward.1} parent=0
    _
  %s9 = ssub.s32 1, %s7
  %s10 = scalar_select 0, %s9, %s7
  $region1: #{core_matching_forward.1} parent=0
    #allocation2 [shape = 'u8[16384]{0}', space=vmem, size = 0x4000, scoped, tag = 'input window, operand 1, single buffered']
    #allocation3 [shape = 's32[1]{0}', space=sflag, size = 0x4, scoped, tag = 'scoped memory for core_matching_forward.1']
    #allocation4 [shape = 's32[1]{0}', space=sflag, size = 0x4, scoped, tag = 'scoped memory for core_matching_forward.1']
    #allocation5 [shape = 'u8[81920]{0}', space=vmem, size = 0x14000, scoped, tag = 'input window, operand 3, single buffered']
    #allocation6 [shape = 's32[1]{0}', space=sflag, size = 0x4, scoped, tag = 'scoped memory for core_matching_forward.1']
    #allocation7 [shape = 'u8[2048]{0}', space=vmem, size = 0x800, scoped, tag = 'output window, operand 0, single buffered']
    %11 = vsyncpa [#allocation3], 0
    %12 = vsyncpa [#allocation6], 0
    %13 = vsyncpa [#allocation4], 0
    // Predicated region
    $region2: #{core_matching_forward.1} parent=1 // pred_check
      _
    $region3: #{core_matching_forward.1} parent=1 // pred_check_branch
      %15 = sbr.rel (0) target = $region5
    $region4: #{core_matching_forward.1} parent=1 // pred_region
      _
    $region5: #{core_matching_forward.1} parent=1 // pred_fallthru
      _
    // Predicated region
    $region6: #{core_matching_forward.1} parent=1 // pred_check
      _
    $region7: #{core_matching_forward.1} parent=1 // pred_check_branch
      %17 = sbr.rel (0) target = $region9
    $region8: #{core_matching_forward.1} parent=1 // pred_region
      %19 = vsyncadd [#allocation3], 0
      %s20 = sshll.u32 %s1, 4
      %s21 = int_to_ptr.hbm [resolvable:$true] %s20
      %s22 = sshll.u32 [#allocation2], 4
      %s23 = int_to_ptr.vmem [resolvable:$true] %s22
      %28 = dma.hbm_to_vmem [thread:$0]  %s21, 512, %s23, [#allocation3], 128, 128, 8
    $region9: #{core_matching_forward.1} parent=1 // pred_fallthru
      _
    // Predicated region
    $region10: #{core_matching_forward.1} parent=1 // pred_check
      _
    $region11: #{core_matching_forward.1} parent=1 // pred_check_branch
      %30 = sbr.rel (0) target = $region13
    $region12: #{core_matching_forward.1} parent=1 // pred_region
      _
    $region13: #{core_matching_forward.1} parent=1 // pred_fallthru
      _
    // Predicated region
    $region14: #{core_matching_forward.1} parent=1 // pred_check
      _
    $region15: #{core_matching_forward.1} parent=1 // pred_check_branch
      %32 = sbr.rel (0) target = $region17
    $region16: #{core_matching_forward.1} parent=1 // pred_region
      %34 = vsyncadd [#allocation6], 0
      %s35 = sshll.u32 %s3, 4
      %s36 = int_to_ptr.hbm [resolvable:$true] %s35
      %s37 = sshll.u32 [#allocation5], 4
      %s38 = int_to_ptr.vmem [resolvable:$true] %s37
      %43 = dma.hbm_to_vmem [thread:$0]  %s36, 2560, %s38, [#allocation6], 256, 256, 16
    $region17: #{core_matching_forward.1} parent=1 // pred_fallthru
      _
    // Predicated region
    $region18: #{core_matching_forward.1} parent=1 // pred_check
      _
    $region19: #{core_matching_forward.1} parent=1 // pred_check_branch
      %45 = sbr.rel (0) target = $region21
    $region20: #{core_matching_forward.1} parent=1 // pred_region
      _
    $region21: #{core_matching_forward.1} parent=1 // pred_fallthru
      _
    // Predicated region
    $region22: #{core_matching_forward.1} parent=1 // pred_check
      _
    $region23: #{core_matching_forward.1} parent=1 // pred_check_branch
      %47 = sbr.rel (0) target = $region25
    $region24: #{core_matching_forward.1} parent=1 // pred_region
      _
    $region25: #{core_matching_forward.1} parent=1 // pred_fallthru
      _
    // Predicated region
    $region26: #{core_matching_forward.1} parent=1 // pred_check
      _
    $region27: #{core_matching_forward.1} parent=1 // pred_check_branch
      %49 = sbr.rel (0) target = $region29
    $region28: #{core_matching_forward.1} parent=1 // pred_region
      %51 = dma.done [#allocation3], 512
    $region29: #{core_matching_forward.1} parent=1 // pred_fallthru
      _
    // Predicated region
    $region30: #{core_matching_forward.1} parent=1 // pred_check
      _
    $region31: #{core_matching_forward.1} parent=1 // pred_check_branch
      %53 = sbr.rel (0) target = $region33
    $region32: #{core_matching_forward.1} parent=1 // pred_region
      %55 = dma.done [#allocation6], 2560
    $region33: #{core_matching_forward.1} parent=1 // pred_fallthru
      _
    %v57 = vld [vmem:[%s0] sm:$0xff]
    %v58 = vld [vmem:[%s0 + $0x8] sm:$0xff]
    %v59 = vld [vmem:[%s0 + $0x10] sm:$0xff]
    %v60 = vld [vmem:[%s0 + $0x18] sm:$0xff]
    %v61 = vld [vmem:[#allocation2] sm:$0xff]
    %v62 = vld [vmem:[#allocation2 + $0x8] sm:$0xff]
    %v63 = vld [vmem:[#allocation2 + $0x10] sm:$0xff]
    %v64 = vld [vmem:[#allocation2 + $0x18] sm:$0xff]
    %v65 = vld [vmem:[%s5 + $0x40] sm:$0xff]
    %v66 = vld [vmem:[%s5 + $0x48] sm:$0xff]
    %v67 = vld [vmem:[%s5 + $0x50] sm:$0xff]
    %v68 = vld [vmem:[%s5 + $0x58] sm:$0xff]
    %v69 = vld [vmem:[%s5 + $0x60] sm:$0xff]
    %v70 = vld [vmem:[%s5 + $0x68] sm:$0xff]
    %v71 = vld [vmem:[%s5 + $0x70] sm:$0xff]
    %v72 = vld [vmem:[%s5 + $0x78] sm:$0xff]
    %v73 = vld [vmem:[%s5 + $0x80] sm:$0xff]
    %v74 = vld [vmem:[%s5 + $0x88] sm:$0xff]
    %v75 = vld [vmem:[%s5 + $0x90] sm:$0xff]
    %v76 = vld [vmem:[%s5 + $0x98] sm:$0xff]
    %v77 = vld [vmem:[%s5 + $0xa0] sm:$0xff]
    %v78 = vld [vmem:[%s5 + $0xa8] sm:$0xff]
    %v79 = vld [vmem:[%s5 + $0xb0] sm:$0xff]
    %v80 = vld [vmem:[%s5 + $0xb8] sm:$0xff]
    %v81 = vld [vmem:[%s5 + $0xc0] sm:$0xff]
    %v82 = vld [vmem:[%s5 + $0xc8] sm:$0xff]
    %v83 = vld [vmem:[%s5 + $0xd0] sm:$0xff]
    %v84 = vld [vmem:[%s5 + $0xd8] sm:$0xff]
    %v85 = vld [vmem:[%s5 + $0xe0] sm:$0xff]
    %v86 = vld [vmem:[%s5 + $0xe8] sm:$0xff]
    %v87 = vld [vmem:[%s5 + $0xf0] sm:$0xff]
    %v88 = vld [vmem:[%s5 + $0xf8] sm:$0xff]
    %v89 = vld [vmem:[%s5 + $0x100] sm:$0xff]
    %v90 = vld [vmem:[%s5 + $0x108] sm:$0xff]
    %v91 = vld [vmem:[%s5 + $0x110] sm:$0xff]
    %v92 = vld [vmem:[%s5 + $0x118] sm:$0xff]
    %v93 = vld [vmem:[%s5 + $0x120] sm:$0xff]
    %v94 = vld [vmem:[%s5 + $0x128] sm:$0xff]
    %v95 = vld [vmem:[%s5 + $0x130] sm:$0xff]
    %v96 = vld [vmem:[%s5 + $0x138] sm:$0xff]
    %v97 = vld [vmem:[%s5 + $0x140] sm:$0xff]
    %v98 = vld [vmem:[%s5 + $0x148] sm:$0xff]
    %v99 = vld [vmem:[%s5 + $0x150] sm:$0xff]
    %v100 = vld [vmem:[%s5 + $0x158] sm:$0xff]
    %v101 = vld [vmem:[%s5 + $0x160] sm:$0xf]
    %v102 = vld [vmem:[%s5 + $0x168] sm:$0xff]
    %v103 = vld [vmem:[%s5 + $0x170] sm:$0xff]
    %v104 = vld [vmem:[%s5 + $0x178] sm:$0xff]
    %v105 = vld [vmem:[%s5 + $0x180] sm:$0xff]
    %v106 = vld [vmem:[%s5 + $0x188] sm:$0xff]
    %v107 = vld [vmem:[%s5 + $0x190] sm:$0xff]
    %v108 = vld [vmem:[%s5 + $0x198] sm:$0xff]
    %v109 = vld [vmem:[%s5 + $0x1a0] sm:$0xff]
    %v110 = vld [vmem:[%s5 + $0x1a8] sm:$0xff]
    %v111 = vld [vmem:[%s5 + $0x1b0] sm:$0xff]
    %v112 = vld [vmem:[%s5 + $0x1b8] sm:$0xff]
    %v113 = vld [vmem:[%s5 + $0x1c0] sm:$0xff]
    %v114 = vld [vmem:[%s5 + $0x1c8] sm:$0xff]
    %v115 = vld [vmem:[%s5 + $0x1d0] sm:$0xff]
    %v116 = vld [vmem:[%s5 + $0x1d8] sm:$0xff]
    %v117 = vld [vmem:[%s5 + $0x1e0] sm:$0xff]
    %v118 = vld [vmem:[%s5 + $0x1e8] sm:$0xff]
    %v119 = vld [vmem:[%s5 + $0x1f0] sm:$0xff]
    %v120 = vld [vmem:[%s5 + $0x1f8] sm:$0xff]
    %v121 = vld [vmem:[%s5 + $0x200] sm:$0xff]
    %v122 = vld [vmem:[%s5 + $0x208] sm:$0xf]
    %v123 = vpack.c.bf16 %v58, %v57
    %v124 = vpack.c.bf16 %v60, %v59
    %v125 = vld [vmem:[%s2] sm:$0xf]
    %v126 = vld [vmem:[%s2 + $0x4] sm:$0xf]
    %v127 = vld [vmem:[%s2 + $0x8] sm:$0xf]
    %v128 = vld [vmem:[%s2 + $0xc] sm:$0xf]
    %v129 = vld [vmem:[%s5] sm:$0x1]
    %v130 = vperm.slane %v129, 0
    %v135 = vunpack.c.l.b16 %v125
    %v136 = vunpack.c.l.b16 %v126
    %v137 = vunpack.c.l.b16 %v127
    %v138 = vunpack.c.l.b16 %v128
    %v139 = vpack.c.b16 %v136, %v135
    %v140 = vpack.c.b16 %v138, %v137
    %vm143 = vcmask 261120
    %v145 = vsel %vm143, %v123, 0
    %v148 = vsel %vm143, %v124, 0
    %150 = vmatpush.bf16.msra.mxu0 0
    %151 = vmatpush.bf16.msra.mxu0 0
    %152 = vmatpush.bf16.msra.mxu0 0
    %153 = vmatpush.bf16.msra.mxu0 0
    %154 = vmatpush.bf16.msra.mxu0 0
    %155 = vmatpush.bf16.msra.mxu0 0
    %156 = vmatpush.bf16.msra.mxu0 %v140
    %157 = vmatpush.bf16.msra.mxu0 %v139
    %158 = vmatmul.bf16.gmra.mxu0 %v145
    %v159 = vpop.f32.mrf.mxu0
    %v160 = vadd.f32 %v130, %v159
    %v161 = vpop.f32.mrf.mxu0
    %v162 = vadd.f32 %v130, %v161
    %163 = vmatmul.bf16.gmra.mxu0 %v148
    %v164 = vpop.f32.mrf.mxu0
    %v165 = vadd.f32 %v130, %v164
    %v166 = vpop.f32.mrf.mxu0
    %v167 = vadd.f32 %v130, %v166
    %168 = vdwg.mxu0
    %v169 = vpack.c.bf16 %v62, %v61
    %v170 = vpack.c.bf16 %v64, %v63
    %v171 = vld [vmem:[%s2 + $0x10] sm:$0xf]
    %v172 = vld [vmem:[%s2 + $0x14] sm:$0xf]
    %v173 = vld [vmem:[%s2 + $0x18] sm:$0xf]
    %v174 = vld [vmem:[%s2 + $0x1c] sm:$0xf]
    %v175 = vld [vmem:[%s5 + $0x8] sm:$0x1]
    %v176 = vperm.slane %v175, 0
    %v181 = vunpack.c.l.b16 %v171
    %v182 = vunpack.c.l.b16 %v172
    %v183 = vunpack.c.l.b16 %v173
    %v184 = vunpack.c.l.b16 %v174
    %v185 = vpack.c.b16 %v182, %v181
    %v186 = vpack.c.b16 %v184, %v183
    %v190 = vsel %vm143, %v169, 0
    %v193 = vsel %vm143, %v170, 0
    %195 = vmatpush.bf16.msra.mxu0 0
    %196 = vmatpush.bf16.msra.mxu0 0
    %197 = vmatpush.bf16.msra.mxu0 0
    %198 = vmatpush.bf16.msra.mxu0 0
    %199 = vmatpush.bf16.msra.mxu0 0
    %200 = vmatpush.bf16.msra.mxu0 0
    %201 = vmatpush.bf16.msra.mxu0 %v186
    %202 = vmatpush.bf16.msra.mxu0 %v185
    %203 = vmatmul.bf16.gmra.mxu0 %v190
    %v204 = vpop.f32.mrf.mxu0
    %v205 = vadd.f32 %v176, %v204
    %v206 = vpop.f32.mrf.mxu0
    %v207 = vadd.f32 %v176, %v206
    %208 = vmatmul.bf16.gmra.mxu0 %v193
    %v209 = vpop.f32.mrf.mxu0
    %v210 = vadd.f32 %v176, %v209
    %v211 = vpop.f32.mrf.mxu0
    %v212 = vadd.f32 %v176, %v211
    %213 = vdwg.mxu0
    %230 = vrot.lane.b32.xlu0 %v65, 32
    %v231 = vpop.permute.xlu0 %230
    %232 = vrot.lane.b32.xlu0 %v66, 32
    %v233 = vpop.permute.xlu0 %232
    %234 = vrot.lane.b32.xlu0 %v67, 32
    %v235 = vpop.permute.xlu0 %234
    %236 = vrot.lane.b32.xlu0 %v68, 32
    %v237 = vpop.permute.xlu0 %236
    %238 = vrot.lane.b32.xlu0 %v69, 32
    %v239 = vpop.permute.xlu0 %238
    %240 = vrot.lane.b32.xlu0 %v70, 32
    %v241 = vpop.permute.xlu0 %240
    %242 = vrot.lane.b32.xlu0 %v71, 32
    %v243 = vpop.permute.xlu0 %242
    %244 = vrot.lane.b32.xlu0 %v72, 32
    %v245 = vpop.permute.xlu0 %244
    %246 = vrot.lane.b32.xlu0 %v73, 32
    %v247 = vpop.permute.xlu0 %246
    %248 = vrot.lane.b32.xlu0 %v74, 32
    %v249 = vpop.permute.xlu0 %248
    %250 = vrot.lane.b32.xlu0 %v75, 32
    %v251 = vpop.permute.xlu0 %250
    %252 = vrot.lane.b32.xlu0 %v76, 32
    %v253 = vpop.permute.xlu0 %252
    %254 = vrot.lane.b32.xlu0 %v77, 32
    %v255 = vpop.permute.xlu0 %254
    %256 = vrot.lane.b32.xlu0 %v78, 32
    %v257 = vpop.permute.xlu0 %256
    %258 = vrot.lane.b32.xlu0 %v79, 32
    %v259 = vpop.permute.xlu0 %258
    %260 = vrot.lane.b32.xlu0 %v80, 32
    %v261 = vpop.permute.xlu0 %260
    %v278 = vmul.f32 %v160, %v231
    %v279 = vmul.f32 %v162, %v233
    %v280 = vmul.f32 %v165, %v235
    %v281 = vmul.f32 %v167, %v237
    %v282 = vmul.f32 %v160, %v239
    %v283 = vmul.f32 %v162, %v241
    %v284 = vmul.f32 %v165, %v243
    %v285 = vmul.f32 %v167, %v245
    %v286 = vmul.f32 %v160, %v247
    %v287 = vmul.f32 %v162, %v249
    %v288 = vmul.f32 %v165, %v251
    %v289 = vmul.f32 %v167, %v253
    %v290 = vmul.f32 %v160, %v255
    %v291 = vmul.f32 %v162, %v257
    %v292 = vmul.f32 %v165, %v259
    %v293 = vmul.f32 %v167, %v261
    %v294 = vpack.c.bf16 %v279, %v278
    %v295 = vpack.c.bf16 %v281, %v280
    %v296 = vpack.c.bf16 %v283, %v282
    %v297 = vpack.c.bf16 %v285, %v284
    %v298 = vpack.c.bf16 %v287, %v286
    %v299 = vpack.c.bf16 %v289, %v288
    %v300 = vpack.c.bf16 %v291, %v290
    %v301 = vpack.c.bf16 %v293, %v292
    %302 = vrot.lane.b32.xlu0 %v65, 64
    %v303 = vpop.permute.xlu0 %302
    %304 = vrot.lane.b32.xlu0 %v66, 64
    %v305 = vpop.permute.xlu0 %304
    %306 = vrot.lane.b32.xlu0 %v67, 64
    %v307 = vpop.permute.xlu0 %306
    %308 = vrot.lane.b32.xlu0 %v68, 64
    %v309 = vpop.permute.xlu0 %308
    %310 = vrot.lane.b32.xlu0 %v69, 64
    %v311 = vpop.permute.xlu0 %310
    %312 = vrot.lane.b32.xlu0 %v70, 64
    %v313 = vpop.permute.xlu0 %312
    %314 = vrot.lane.b32.xlu0 %v71, 64
    %v315 = vpop.permute.xlu0 %314
    %316 = vrot.lane.b32.xlu0 %v72, 64
    %v317 = vpop.permute.xlu0 %316
    %318 = vrot.lane.b32.xlu0 %v73, 64
    %v319 = vpop.permute.xlu0 %318
    %320 = vrot.lane.b32.xlu0 %v74, 64
    %v321 = vpop.permute.xlu0 %320
    %322 = vrot.lane.b32.xlu0 %v75, 64
    %v323 = vpop.permute.xlu0 %322
    %324 = vrot.lane.b32.xlu0 %v76, 64
    %v325 = vpop.permute.xlu0 %324
    %326 = vrot.lane.b32.xlu0 %v77, 64
    %v327 = vpop.permute.xlu0 %326
    %328 = vrot.lane.b32.xlu0 %v78, 64
    %v329 = vpop.permute.xlu0 %328
    %330 = vrot.lane.b32.xlu0 %v79, 64
    %v331 = vpop.permute.xlu0 %330
    %332 = vrot.lane.b32.xlu0 %v80, 64
    %v333 = vpop.permute.xlu0 %332
    %v350 = vmul.f32 %v160, %v303
    %v351 = vmul.f32 %v162, %v305
    %v352 = vmul.f32 %v165, %v307
    %v353 = vmul.f32 %v167, %v309
    %v354 = vmul.f32 %v160, %v311
    %v355 = vmul.f32 %v162, %v313
    %v356 = vmul.f32 %v165, %v315
    %v357 = vmul.f32 %v167, %v317
    %v358 = vmul.f32 %v160, %v319
    %v359 = vmul.f32 %v162, %v321
    %v360 = vmul.f32 %v165, %v323
    %v361 = vmul.f32 %v167, %v325
    %v362 = vmul.f32 %v160, %v327
    %v363 = vmul.f32 %v162, %v329
    %v364 = vmul.f32 %v165, %v331
    %v365 = vmul.f32 %v167, %v333
    %v366 = vpack.c.bf16 %v351, %v350
    %v367 = vpack.c.bf16 %v353, %v352
    %v368 = vpack.c.bf16 %v355, %v354
    %v369 = vpack.c.bf16 %v357, %v356
    %v370 = vpack.c.bf16 %v359, %v358
    %v371 = vpack.c.bf16 %v361, %v360
    %v372 = vpack.c.bf16 %v363, %v362
    %v373 = vpack.c.bf16 %v365, %v364
    %v374 = vpack.c.bf16 %v207, %v205
    %v375 = vpack.c.bf16 %v212, %v210
    %384 = vrot.lane.b32.xlu0 %v294, 96
    %v385 = vpop.permute.xlu0 %384
    %386 = vrot.lane.b32.xlu0 %v295, 96
    %v387 = vpop.permute.xlu0 %386
    %388 = vrot.lane.b32.xlu0 %v296, 96
    %v389 = vpop.permute.xlu0 %388
    %390 = vrot.lane.b32.xlu0 %v297, 96
    %v391 = vpop.permute.xlu0 %390
    %392 = vrot.lane.b32.xlu0 %v298, 96
    %v393 = vpop.permute.xlu0 %392
    %394 = vrot.lane.b32.xlu0 %v299, 96
    %v395 = vpop.permute.xlu0 %394
    %396 = vrot.lane.b32.xlu0 %v300, 96
    %v397 = vpop.permute.xlu0 %396
    %398 = vrot.lane.b32.xlu0 %v301, 96
    %v399 = vpop.permute.xlu0 %398
    %v401 = vsel %vm143, %v374, 0
    %v404 = vsel %vm143, %v375, 0
    %v407 = vsel %vm143, %v385, 0
    %v410 = vsel %vm143, %v387, 0
    %v413 = vsel %vm143, %v389, 0
    %v416 = vsel %vm143, %v391, 0
    %v419 = vsel %vm143, %v393, 0
    %v422 = vsel %vm143, %v395, 0
    %v425 = vsel %vm143, %v397, 0
    %v428 = vsel %vm143, %v399, 0
    %430 = vmatpush.bf16.xpose.msra.mxu0 %v428
    %431 = vmatpush.bf16.xpose.msra.mxu0 %v425
    %432 = vmatpush.bf16.xpose.msra.mxu0 %v422
    %433 = vmatpush.bf16.xpose.msra.mxu0 %v419
    %434 = vmatpush.bf16.xpose.msra.mxu0 %v416
    %435 = vmatpush.bf16.xpose.msra.mxu0 %v413
    %436 = vmatpush.bf16.xpose.msra.mxu0 %v410
    %437 = vmatpush.bf16.xpose.msra.mxu0 %v407
    %438 = vmatmul.bf16.gmra.mxu0 %v401
    %v439 = vpop.f32.mrf.mxu0
    %v440 = vadd.f32 %v97, %v439
    %v441 = vpop.f32.mrf.mxu0
    %v442 = vadd.f32 %v98, %v441
    %443 = vmatmul.bf16.gmra.mxu0 %v404
    %v444 = vpop.f32.mrf.mxu0
    %v445 = vadd.f32 %v99, %v444
    %v446 = vpop.f32.mrf.mxu0
    %v447 = vadd.f32 %v100, %v446
    %448 = vdwg.mxu0
    %449 = vmax.xlane.f32.xlu0 %v440
    %v450 = vpop.xlane.xlu0 %449
    %451 = vmax.xlane.f32.xlu0 %v442
    %v452 = vpop.xlane.xlu0 %451
    %453 = vmax.xlane.f32.xlu0 %v445
    %v454 = vpop.xlane.xlu0 %453
    %455 = vmax.xlane.f32.xlu0 %v447
    %v456 = vpop.xlane.xlu0 %455
    %v457 = vsub.f32 %v440, %v450
    %v458 = vsub.f32 %v442, %v452
    %v459 = vsub.f32 %v445, %v454
    %v460 = vsub.f32 %v447, %v456
    %v461 = vmul.f32 %v457, 1.442695
    %v462 = vpow.pop %v461
    %v463 = vmul.f32 %v458, 1.442695
    %v464 = vpow.pop %v463
    %v465 = vmul.f32 %v459, 1.442695
    %v466 = vpow.pop %v465
    %v467 = vmul.f32 %v460, 1.442695
    %v468 = vpow.pop %v467
    %469 = vmatpush.msra.mxu0 %v96
    %470 = vmatpush.msra.mxu0 %v95
    %471 = vmatpush.msra.mxu0 %v94
    %472 = vmatpush.msra.mxu0 %v93
    %473 = vmatpush.msra.mxu0 %v92
    %474 = vmatpush.msra.mxu0 %v91
    %475 = vmatpush.msra.mxu0 %v90
    %476 = vmatpush.msra.mxu0 %v89
    %477 = vmatpush.msra.mxu0 %v88
    %478 = vmatpush.msra.mxu0 %v87
    %479 = vmatpush.msra.mxu0 %v86
    %480 = vmatpush.msra.mxu0 %v85
    %481 = vmatpush.msra.mxu0 %v84
    %482 = vmatpush.msra.mxu0 %v83
    %483 = vmatpush.msra.mxu0 %v82
    %484 = vmatpush.msra.mxu0 %v81
    %485 = vmatmul.f32.gmra.mxu0 %v462
    %v486 = vpop.f32.mrf.mxu0
    %v487 = vadd.f32 1e-30, %v486
    %488 = vmatmul.f32.gmra.mxu0 %v464
    %v489 = vpop.f32.mrf.mxu0
    %v490 = vadd.f32 1e-30, %v489
    %491 = vmatmul.f32.gmra.mxu0 %v466
    %v492 = vpop.f32.mrf.mxu0
    %v493 = vadd.f32 1e-30, %v492
    %494 = vmatmul.f32.gmra.mxu0 %v468
    %v495 = vpop.f32.mrf.mxu0
    %v496 = vadd.f32 1e-30, %v495
    %497 = vdwg.mxu0
    %v498 = vrcp.pop %v487
    %v499 = vmul.f32 %v487, %v498
    %v500 = vsub.f32 1.0, %v499
    %v501 = vmul.f32 %v498, %v500
    %v502 = vadd.f32 %v498, %v501
    %vm503 = vweird.f32 %v487
    %vm504 = vweird.f32 %v498
    %vm505 = vmor %vm503, %vm504
    %v506 = vsel %vm505, %v498, %v502
    %v507 = vand.u32 2147483647, %v487
    %vm508 = vcmp.eq.f32.partialorder %v507, 8.507059e+37
    %v509 = vand.u32 %v487, 2147483648
    %v510 = vor.u32 1.1754944e-38, %v509
    %v511 = vsel %vm508, %v510, %v506
    %v512 = vmul.f32 %v462, %v511
    %v513 = vrcp.pop %v490
    %v514 = vmul.f32 %v490, %v513
    %v515 = vsub.f32 1.0, %v514
    %v516 = vmul.f32 %v513, %v515
    %v517 = vadd.f32 %v513, %v516
    %vm518 = vweird.f32 %v490
    %vm519 = vweird.f32 %v513
    %vm520 = vmor %vm518, %vm519
    %v521 = vsel %vm520, %v513, %v517
    %v522 = vand.u32 2147483647, %v490
    %vm523 = vcmp.eq.f32.partialorder %v522, 8.507059e+37
    %v524 = vand.u32 %v490, 2147483648
    %v525 = vor.u32 1.1754944e-38, %v524
    %v526 = vsel %vm523, %v525, %v521
    %v527 = vmul.f32 %v464, %v526
    %v528 = vrcp.pop %v493
    %v529 = vmul.f32 %v493, %v528
    %v530 = vsub.f32 1.0, %v529
    %v531 = vmul.f32 %v528, %v530
    %v532 = vadd.f32 %v528, %v531
    %vm533 = vweird.f32 %v493
    %vm534 = vweird.f32 %v528
    %vm535 = vmor %vm533, %vm534
    %v536 = vsel %vm535, %v528, %v532
    %v537 = vand.u32 2147483647, %v493
    %vm538 = vcmp.eq.f32.partialorder %v537, 8.507059e+37
    %v539 = vand.u32 %v493, 2147483648
    %v540 = vor.u32 1.1754944e-38, %v539
    %v541 = vsel %vm538, %v540, %v536
    %v542 = vmul.f32 %v466, %v541
    %v543 = vrcp.pop %v496
    %v544 = vmul.f32 %v496, %v543
    %v545 = vsub.f32 1.0, %v544
    %v546 = vmul.f32 %v543, %v545
    %v547 = vadd.f32 %v543, %v546
    %vm548 = vweird.f32 %v496
    %vm549 = vweird.f32 %v543
    %vm550 = vmor %vm548, %vm549
    %v551 = vsel %vm550, %v543, %v547
    %v552 = vand.u32 2147483647, %v496
    %vm553 = vcmp.eq.f32.partialorder %v552, 8.507059e+37
    %v554 = vand.u32 %v496, 2147483648
    %v555 = vor.u32 1.1754944e-38, %v554
    %v556 = vsel %vm553, %v555, %v551
    %v557 = vmul.f32 %v468, %v556
    %v558 = vpack.c.bf16 %v527, %v512
    %v559 = vpack.c.bf16 %v557, %v542
    %568 = vrot.lane.b32.xlu0 %v366, 64
    %v569 = vpop.permute.xlu0 %568
    %570 = vrot.lane.b32.xlu0 %v367, 64
    %v571 = vpop.permute.xlu0 %570
    %572 = vrot.lane.b32.xlu0 %v368, 64
    %v573 = vpop.permute.xlu0 %572
    %574 = vrot.lane.b32.xlu0 %v369, 64
    %v575 = vpop.permute.xlu0 %574
    %576 = vrot.lane.b32.xlu0 %v370, 64
    %v577 = vpop.permute.xlu0 %576
    %578 = vrot.lane.b32.xlu0 %v371, 64
    %v579 = vpop.permute.xlu0 %578
    %580 = vrot.lane.b32.xlu0 %v372, 64
    %v581 = vpop.permute.xlu0 %580
    %582 = vrot.lane.b32.xlu0 %v373, 64
    %v583 = vpop.permute.xlu0 %582
    %592 = vmatpush.bf16.msra.mxu0 %v583
    %593 = vmatpush.bf16.msra.mxu0 %v581
    %594 = vmatpush.bf16.msra.mxu0 %v579
    %595 = vmatpush.bf16.msra.mxu0 %v577
    %596 = vmatpush.bf16.msra.mxu0 %v575
    %597 = vmatpush.bf16.msra.mxu0 %v573
    %598 = vmatpush.bf16.msra.mxu0 %v571
    %599 = vmatpush.bf16.msra.mxu0 %v569
    %600 = vmatmul.bf16.gmra.mxu0 %v558
    %v601 = vpop.f32.mrf.mxu0
    %v602 = vadd.f32 0.0, %v601
    %v603 = vpop.f32.mrf.mxu0
    %v604 = vadd.f32 0.0, %v603
    %605 = vmatmul.bf16.gmra.mxu0 %v559
    %v606 = vpop.f32.mrf.mxu0
    %v607 = vadd.f32 0.0, %v606
    %v608 = vpop.f32.mrf.mxu0
    %v609 = vadd.f32 0.0, %v608
    %610 = vdwg.mxu0
    %v611 = vmul.f32 %v205, %v231
    %v612 = vmul.f32 %v207, %v233
    %v613 = vmul.f32 %v210, %v235
    %v614 = vmul.f32 %v212, %v237
    %v615 = vmul.f32 %v205, %v239
    %v616 = vmul.f32 %v207, %v241
    %v617 = vmul.f32 %v210, %v243
    %v618 = vmul.f32 %v212, %v245
    %v619 = vmul.f32 %v205, %v247
    %v620 = vmul.f32 %v207, %v249
    %v621 = vmul.f32 %v210, %v251
    %v622 = vmul.f32 %v212, %v253
    %v623 = vmul.f32 %v205, %v255
    %v624 = vmul.f32 %v207, %v257
    %v625 = vmul.f32 %v210, %v259
    %v626 = vmul.f32 %v212, %v261
    %v627 = vpack.c.bf16 %v612, %v611
    %v628 = vpack.c.bf16 %v614, %v613
    %v629 = vpack.c.bf16 %v616, %v615
    %v630 = vpack.c.bf16 %v618, %v617
    %v631 = vpack.c.bf16 %v620, %v619
    %v632 = vpack.c.bf16 %v622, %v621
    %v633 = vpack.c.bf16 %v624, %v623
    %v634 = vpack.c.bf16 %v626, %v625
    %v635 = vmul.f32 %v205, %v303
    %v636 = vmul.f32 %v207, %v305
    %v637 = vmul.f32 %v210, %v307
    %v638 = vmul.f32 %v212, %v309
    %v639 = vmul.f32 %v205, %v311
    %v640 = vmul.f32 %v207, %v313
    %v641 = vmul.f32 %v210, %v315
    %v642 = vmul.f32 %v212, %v317
    %v643 = vmul.f32 %v205, %v319
    %v644 = vmul.f32 %v207, %v321
    %v645 = vmul.f32 %v210, %v323
    %v646 = vmul.f32 %v212, %v325
    %v647 = vmul.f32 %v205, %v327
    %v648 = vmul.f32 %v207, %v329
    %v649 = vmul.f32 %v210, %v331
    %v650 = vmul.f32 %v212, %v333
    %v651 = vpack.c.bf16 %v636, %v635
    %v652 = vpack.c.bf16 %v638, %v637
    %v653 = vpack.c.bf16 %v640, %v639
    %v654 = vpack.c.bf16 %v642, %v641
    %v655 = vpack.c.bf16 %v644, %v643
    %v656 = vpack.c.bf16 %v646, %v645
    %v657 = vpack.c.bf16 %v648, %v647
    %v658 = vpack.c.bf16 %v650, %v649
    %v659 = vpack.c.bf16 %v162, %v160
    %v660 = vpack.c.bf16 %v167, %v165
    %669 = vrot.lane.b32.xlu0 %v627, 96
    %v670 = vpop.permute.xlu0 %669
    %671 = vrot.lane.b32.xlu0 %v628, 96
    %v672 = vpop.permute.xlu0 %671
    %673 = vrot.lane.b32.xlu0 %v629, 96
    %v674 = vpop.permute.xlu0 %673
    %675 = vrot.lane.b32.xlu0 %v630, 96
    %v676 = vpop.permute.xlu0 %675
    %677 = vrot.lane.b32.xlu0 %v631, 96
    %v678 = vpop.permute.xlu0 %677
    %679 = vrot.lane.b32.xlu0 %v632, 96
    %v680 = vpop.permute.xlu0 %679
    %681 = vrot.lane.b32.xlu0 %v633, 96
    %v682 = vpop.permute.xlu0 %681
    %683 = vrot.lane.b32.xlu0 %v634, 96
    %v684 = vpop.permute.xlu0 %683
    %v686 = vsel %vm143, %v659, 0
    %v689 = vsel %vm143, %v660, 0
    %v692 = vsel %vm143, %v670, 0
    %v695 = vsel %vm143, %v672, 0
    %v698 = vsel %vm143, %v674, 0
    %v701 = vsel %vm143, %v676, 0
    %v704 = vsel %vm143, %v678, 0
    %v707 = vsel %vm143, %v680, 0
    %v710 = vsel %vm143, %v682, 0
    %v713 = vsel %vm143, %v684, 0
    %715 = vmatpush.bf16.xpose.msra.mxu0 %v713
    %716 = vmatpush.bf16.xpose.msra.mxu0 %v710
    %717 = vmatpush.bf16.xpose.msra.mxu0 %v707
    %718 = vmatpush.bf16.xpose.msra.mxu0 %v704
    %719 = vmatpush.bf16.xpose.msra.mxu0 %v701
    %720 = vmatpush.bf16.xpose.msra.mxu0 %v698
    %721 = vmatpush.bf16.xpose.msra.mxu0 %v695
    %722 = vmatpush.bf16.xpose.msra.mxu0 %v692
    %723 = vmatmul.bf16.gmra.mxu0 %v686
    %v724 = vpop.f32.mrf.mxu0
    %v725 = vadd.f32 %v97, %v724
    %v726 = vpop.f32.mrf.mxu0
    %v727 = vadd.f32 %v98, %v726
    %728 = vmatmul.bf16.gmra.mxu0 %v689
    %v729 = vpop.f32.mrf.mxu0
    %v730 = vadd.f32 %v99, %v729
    %v731 = vpop.f32.mrf.mxu0
    %v732 = vadd.f32 %v100, %v731
    %733 = vdwg.mxu0
    %734 = vmax.xlane.f32.xlu0 %v725
    %v735 = vpop.xlane.xlu0 %734
    %736 = vmax.xlane.f32.xlu0 %v727
    %v737 = vpop.xlane.xlu0 %736
    %738 = vmax.xlane.f32.xlu0 %v730
    %v739 = vpop.xlane.xlu0 %738
    %740 = vmax.xlane.f32.xlu0 %v732
    %v741 = vpop.xlane.xlu0 %740
    %v742 = vsub.f32 %v725, %v735
    %v743 = vsub.f32 %v727, %v737
    %v744 = vsub.f32 %v730, %v739
    %v745 = vsub.f32 %v732, %v741
    %v746 = vmul.f32 %v742, 1.442695
    %v747 = vpow.pop %v746
    %v748 = vmul.f32 %v743, 1.442695
    %v749 = vpow.pop %v748
    %v750 = vmul.f32 %v744, 1.442695
    %v751 = vpow.pop %v750
    %v752 = vmul.f32 %v745, 1.442695
    %v753 = vpow.pop %v752
    %754 = vmatpush.msra.mxu0 %v96
    %755 = vmatpush.msra.mxu0 %v95
    %756 = vmatpush.msra.mxu0 %v94
    %757 = vmatpush.msra.mxu0 %v93
    %758 = vmatpush.msra.mxu0 %v92
    %759 = vmatpush.msra.mxu0 %v91
    %760 = vmatpush.msra.mxu0 %v90
    %761 = vmatpush.msra.mxu0 %v89
    %762 = vmatpush.msra.mxu0 %v88
    %763 = vmatpush.msra.mxu0 %v87
    %764 = vmatpush.msra.mxu0 %v86
    %765 = vmatpush.msra.mxu0 %v85
    %766 = vmatpush.msra.mxu0 %v84
    %767 = vmatpush.msra.mxu0 %v83
    %768 = vmatpush.msra.mxu0 %v82
    %769 = vmatpush.msra.mxu0 %v81
    %770 = vmatmul.f32.gmra.mxu0 %v747
    %v771 = vpop.f32.mrf.mxu0
    %v772 = vadd.f32 1e-30, %v771
    %773 = vmatmul.f32.gmra.mxu0 %v749
    %v774 = vpop.f32.mrf.mxu0
    %v775 = vadd.f32 1e-30, %v774
    %776 = vmatmul.f32.gmra.mxu0 %v751
    %v777 = vpop.f32.mrf.mxu0
    %v778 = vadd.f32 1e-30, %v777
    %779 = vmatmul.f32.gmra.mxu0 %v753
    %v780 = vpop.f32.mrf.mxu0
    %v781 = vadd.f32 1e-30, %v780
    %782 = vdwg.mxu0
    %v783 = vrcp.pop %v772
    %v784 = vmul.f32 %v772, %v783
    %v785 = vsub.f32 1.0, %v784
    %v786 = vmul.f32 %v783, %v785
    %v787 = vadd.f32 %v783, %v786
    %vm788 = vweird.f32 %v772
    %vm789 = vweird.f32 %v783
    %vm790 = vmor %vm788, %vm789
    %v791 = vsel %vm790, %v783, %v787
    %v792 = vand.u32 2147483647, %v772
    %vm793 = vcmp.eq.f32.partialorder %v792, 8.507059e+37
    %v794 = vand.u32 %v772, 2147483648
    %v795 = vor.u32 1.1754944e-38, %v794
    %v796 = vsel %vm793, %v795, %v791
    %v797 = vmul.f32 %v747, %v796
    %v798 = vrcp.pop %v775
    %v799 = vmul.f32 %v775, %v798
    %v800 = vsub.f32 1.0, %v799
    %v801 = vmul.f32 %v798, %v800
    %v802 = vadd.f32 %v798, %v801
    %vm803 = vweird.f32 %v775
    %vm804 = vweird.f32 %v798
    %vm805 = vmor %vm803, %vm804
    %v806 = vsel %vm805, %v798, %v802
    %v807 = vand.u32 2147483647, %v775
    %vm808 = vcmp.eq.f32.partialorder %v807, 8.507059e+37
    %v809 = vand.u32 %v775, 2147483648
    %v810 = vor.u32 1.1754944e-38, %v809
    %v811 = vsel %vm808, %v810, %v806
    %v812 = vmul.f32 %v749, %v811
    %v813 = vrcp.pop %v778
    %v814 = vmul.f32 %v778, %v813
    %v815 = vsub.f32 1.0, %v814
    %v816 = vmul.f32 %v813, %v815
    %v817 = vadd.f32 %v813, %v816
    %vm818 = vweird.f32 %v778
    %vm819 = vweird.f32 %v813
    %vm820 = vmor %vm818, %vm819
    %v821 = vsel %vm820, %v813, %v817
    %v822 = vand.u32 2147483647, %v778
    %vm823 = vcmp.eq.f32.partialorder %v822, 8.507059e+37
    %v824 = vand.u32 %v778, 2147483648
    %v825 = vor.u32 1.1754944e-38, %v824
    %v826 = vsel %vm823, %v825, %v821
    %v827 = vmul.f32 %v751, %v826
    %v828 = vrcp.pop %v781
    %v829 = vmul.f32 %v781, %v828
    %v830 = vsub.f32 1.0, %v829
    %v831 = vmul.f32 %v828, %v830
    %v832 = vadd.f32 %v828, %v831
    %vm833 = vweird.f32 %v781
    %vm834 = vweird.f32 %v828
    %vm835 = vmor %vm833, %vm834
    %v836 = vsel %vm835, %v828, %v832
    %v837 = vand.u32 2147483647, %v781
    %vm838 = vcmp.eq.f32.partialorder %v837, 8.507059e+37
    %v839 = vand.u32 %v781, 2147483648
    %v840 = vor.u32 1.1754944e-38, %v839
    %v841 = vsel %vm838, %v840, %v836
    %v842 = vmul.f32 %v753, %v841
    %v843 = vpack.c.bf16 %v812, %v797
    %v844 = vpack.c.bf16 %v842, %v827
    %853 = vrot.lane.b32.xlu0 %v651, 64
    %v854 = vpop.permute.xlu0 %853
    %855 = vrot.lane.b32.xlu0 %v652, 64
    %v856 = vpop.permute.xlu0 %855
    %857 = vrot.lane.b32.xlu0 %v653, 64
    %v858 = vpop.permute.xlu0 %857
    %859 = vrot.lane.b32.xlu0 %v654, 64
    %v860 = vpop.permute.xlu0 %859
    %861 = vrot.lane.b32.xlu0 %v655, 64
    %v862 = vpop.permute.xlu0 %861
    %863 = vrot.lane.b32.xlu0 %v656, 64
    %v864 = vpop.permute.xlu0 %863
    %865 = vrot.lane.b32.xlu0 %v657, 64
    %v866 = vpop.permute.xlu0 %865
    %867 = vrot.lane.b32.xlu0 %v658, 64
    %v868 = vpop.permute.xlu0 %867
    %877 = vmatpush.bf16.msra.mxu0 %v868
    %878 = vmatpush.bf16.msra.mxu0 %v866
    %879 = vmatpush.bf16.msra.mxu0 %v864
    %880 = vmatpush.bf16.msra.mxu0 %v862
    %881 = vmatpush.bf16.msra.mxu0 %v860
    %882 = vmatpush.bf16.msra.mxu0 %v858
    %883 = vmatpush.bf16.msra.mxu0 %v856
    %884 = vmatpush.bf16.msra.mxu0 %v854
    %885 = vmatmul.bf16.gmra.mxu0 %v843
    %v886 = vpop.f32.mrf.mxu0
    %v887 = vadd.f32 0.0, %v886
    %v888 = vpop.f32.mrf.mxu0
    %v889 = vadd.f32 0.0, %v888
    %890 = vmatmul.bf16.gmra.mxu0 %v844
    %v891 = vpop.f32.mrf.mxu0
    %v892 = vadd.f32 0.0, %v891
    %v893 = vpop.f32.mrf.mxu0
    %v894 = vadd.f32 0.0, %v893
    %895 = vdwg.mxu0
    %v896 = vpack.c.bf16 %v604, %v602
    %v897 = vpack.c.bf16 %v609, %v607
    %v898 = vld [vmem:[%s2 + $0x20] sm:$0xf]
    %v899 = vld [vmem:[%s2 + $0x24] sm:$0xf]
    %v900 = vld [vmem:[%s2 + $0x28] sm:$0xf]
    %v901 = vld [vmem:[%s2 + $0x2c] sm:$0xf]
    %v902 = vld [vmem:[%s5 + $0x10] sm:$0x1]
    %v903 = vperm.slane %v902, 0
    %v908 = vunpack.c.l.b16 %v898
    %v909 = vunpack.c.l.b16 %v899
    %v910 = vunpack.c.l.b16 %v900
    %v911 = vunpack.c.l.b16 %v901
    %v912 = vpack.c.b16 %v909, %v908
    %v913 = vpack.c.b16 %v911, %v910
    %v917 = vsel %vm143, %v896, 0
    %v920 = vsel %vm143, %v897, 0
    %922 = vmatpush.bf16.msra.mxu0 0
    %923 = vmatpush.bf16.msra.mxu0 0
    %924 = vmatpush.bf16.msra.mxu0 0
    %925 = vmatpush.bf16.msra.mxu0 0
    %926 = vmatpush.bf16.msra.mxu0 0
    %927 = vmatpush.bf16.msra.mxu0 0
    %928 = vmatpush.bf16.msra.mxu0 %v913
    %929 = vmatpush.bf16.msra.mxu0 %v912
    %930 = vmatmul.bf16.gmra.mxu0 %v917
    %v931 = vpop.f32.mrf.mxu0
    %v932 = vadd.f32 %v903, %v931
    %v933 = vpop.f32.mrf.mxu0
    %v934 = vadd.f32 %v903, %v933
    %935 = vmatmul.bf16.gmra.mxu0 %v920
    %v936 = vpop.f32.mrf.mxu0
    %v937 = vadd.f32 %v903, %v936
    %v938 = vpop.f32.mrf.mxu0
    %v939 = vadd.f32 %v903, %v938
    %940 = vdwg.mxu0
    %v941 = vpack.c.bf16 %v889, %v887
    %v942 = vpack.c.bf16 %v894, %v892
    %v943 = vld [vmem:[%s2 + $0x30] sm:$0xf]
    %v944 = vld [vmem:[%s2 + $0x34] sm:$0xf]
    %v945 = vld [vmem:[%s2 + $0x38] sm:$0xf]
    %v946 = vld [vmem:[%s2 + $0x3c] sm:$0xf]
    %v947 = vld [vmem:[%s5 + $0x18] sm:$0x1]
    %v948 = vperm.slane %v947, 0
    %v953 = vunpack.c.l.b16 %v943
    %v954 = vunpack.c.l.b16 %v944
    %v955 = vunpack.c.l.b16 %v945
    %v956 = vunpack.c.l.b16 %v946
    %v957 = vpack.c.b16 %v954, %v953
    %v958 = vpack.c.b16 %v956, %v955
    %v962 = vsel %vm143, %v941, 0
    %v965 = vsel %vm143, %v942, 0
    %967 = vmatpush.bf16.msra.mxu0 0
    %968 = vmatpush.bf16.msra.mxu0 0
    %969 = vmatpush.bf16.msra.mxu0 0
    %970 = vmatpush.bf16.msra.mxu0 0
    %971 = vmatpush.bf16.msra.mxu0 0
    %972 = vmatpush.bf16.msra.mxu0 0
    %973 = vmatpush.bf16.msra.mxu0 %v958
    %974 = vmatpush.bf16.msra.mxu0 %v957
    %975 = vmatmul.bf16.gmra.mxu0 %v962
    %v976 = vpop.f32.mrf.mxu0
    %v977 = vadd.f32 %v948, %v976
    %v978 = vpop.f32.mrf.mxu0
    %v979 = vadd.f32 %v948, %v978
    %980 = vmatmul.bf16.gmra.mxu0 %v965
    %v981 = vpop.f32.mrf.mxu0
    %v982 = vadd.f32 %v948, %v981
    %v983 = vpop.f32.mrf.mxu0
    %v984 = vadd.f32 %v948, %v983
    %985 = vdwg.mxu0
    %v986 = vmul.f32 %v932, %v231
    %v987 = vmul.f32 %v934, %v233
    %v988 = vmul.f32 %v937, %v235
    %v989 = vmul.f32 %v939, %v237
    %v990 = vmul.f32 %v932, %v239
    %v991 = vmul.f32 %v934, %v241
    %v992 = vmul.f32 %v937, %v243
    %v993 = vmul.f32 %v939, %v245
    %v994 = vmul.f32 %v932, %v247
    %v995 = vmul.f32 %v934, %v249
    %v996 = vmul.f32 %v937, %v251
    %v997 = vmul.f32 %v939, %v253
    %v998 = vmul.f32 %v932, %v255
    %v999 = vmul.f32 %v934, %v257
    %v1000 = vmul.f32 %v937, %v259
    %v1001 = vmul.f32 %v939, %v261
    %v1002 = vpack.c.bf16 %v987, %v986
    %v1003 = vpack.c.bf16 %v989, %v988
    %v1004 = vpack.c.bf16 %v991, %v990
    %v1005 = vpack.c.bf16 %v993, %v992
    %v1006 = vpack.c.bf16 %v995, %v994
    %v1007 = vpack.c.bf16 %v997, %v996
    %v1008 = vpack.c.bf16 %v999, %v998
    %v1009 = vpack.c.bf16 %v1001, %v1000
    %v1010 = vmul.f32 %v932, %v303
    %v1011 = vmul.f32 %v934, %v305
    %v1012 = vmul.f32 %v937, %v307
    %v1013 = vmul.f32 %v939, %v309
    %v1014 = vmul.f32 %v932, %v311
    %v1015 = vmul.f32 %v934, %v313
    %v1016 = vmul.f32 %v937, %v315
    %v1017 = vmul.f32 %v939, %v317
    %v1018 = vmul.f32 %v932, %v319
    %v1019 = vmul.f32 %v934, %v321
    %v1020 = vmul.f32 %v937, %v323
    %v1021 = vmul.f32 %v939, %v325
    %v1022 = vmul.f32 %v932, %v327
    %v1023 = vmul.f32 %v934, %v329
    %v1024 = vmul.f32 %v937, %v331
    %v1025 = vmul.f32 %v939, %v333
    %v1026 = vpack.c.bf16 %v1011, %v1010
    %v1027 = vpack.c.bf16 %v1013, %v1012
    %v1028 = vpack.c.bf16 %v1015, %v1014
    %v1029 = vpack.c.bf16 %v1017, %v1016
    %v1030 = vpack.c.bf16 %v1019, %v1018
    %v1031 = vpack.c.bf16 %v1021, %v1020
    %v1032 = vpack.c.bf16 %v1023, %v1022
    %v1033 = vpack.c.bf16 %v1025, %v1024
    %v1034 = vpack.c.bf16 %v932, %v932
    %v1035 = vpack.c.bf16 %v934, %v934
    %v1036 = vpack.c.bf16 %v937, %v937
    %v1037 = vpack.c.bf16 %v939, %v939
    %v1042 = vunpack.c.l.b16 %v1034
    %v1043 = vunpack.c.l.b16 %v1035
    %v1044 = vunpack.c.l.b16 %v1036
    %v1045 = vunpack.c.l.b16 %v1037
    %v1046 = vrot.slane %v1043, 7
    %vm1047 = vcmask 1041409
    %v1048 = vsel %vm1047, %v1046, %v1042
    %v1049 = vrot.slane %v1044, 6
    %vm1050 = vcmask 1042434
    %v1051 = vsel %vm1050, %v1049, %v1048
    %v1052 = vrot.slane %v1045, 5
    %vm1053 = vcmask 1043459
    %v1054 = vsel %vm1053, %v1052, %v1051
    %v1055 = vpack.c.b16 %v1054, %v1054
    %1064 = vrot.lane.b32.xlu0 %v1002, 96
    %v1065 = vpop.permute.xlu0 %1064
    %1066 = vrot.lane.b32.xlu0 %v1003, 96
    %v1067 = vpop.permute.xlu0 %1066
    %1068 = vrot.lane.b32.xlu0 %v1004, 96
    %v1069 = vpop.permute.xlu0 %1068
    %1070 = vrot.lane.b32.xlu0 %v1005, 96
    %v1071 = vpop.permute.xlu0 %1070
    %1072 = vrot.lane.b32.xlu0 %v1006, 96
    %v1073 = vpop.permute.xlu0 %1072
    %1074 = vrot.lane.b32.xlu0 %v1007, 96
    %v1075 = vpop.permute.xlu0 %1074
    %1076 = vrot.lane.b32.xlu0 %v1008, 96
    %v1077 = vpop.permute.xlu0 %1076
    %1078 = vrot.lane.b32.xlu0 %v1009, 96
    %v1079 = vpop.permute.xlu0 %1078
    %v1081 = vsel %vm143, %v1055, 0
    %v1084 = vsel %vm143, %v1065, 0
    %v1087 = vsel %vm143, %v1067, 0
    %v1090 = vsel %vm143, %v1069, 0
    %v1093 = vsel %vm143, %v1071, 0
    %v1096 = vsel %vm143, %v1073, 0
    %v1099 = vsel %vm143, %v1075, 0
    %v1102 = vsel %vm143, %v1077, 0
    %v1105 = vsel %vm143, %v1079, 0
    %1107 = vmatpush.bf16.xpose.msra.mxu0 %v1105
    %1108 = vmatpush.bf16.xpose.msra.mxu0 %v1102
    %1109 = vmatpush.bf16.xpose.msra.mxu0 %v1099
    %1110 = vmatpush.bf16.xpose.msra.mxu0 %v1096
    %1111 = vmatpush.bf16.xpose.msra.mxu0 %v1093
    %1112 = vmatpush.bf16.xpose.msra.mxu0 %v1090
    %1113 = vmatpush.bf16.xpose.msra.mxu0 %v1087
    %1114 = vmatpush.bf16.xpose.msra.mxu0 %v1084
    %1115 = vmatmul.bf16.gmra.mxu0 %v1081
    %v1116 = vpop.f32.mrf.mxu0
    %v1117 = vadd.f32 %v101, %v1116
    %v1118 = vpop.f32.mrf.mxu0
    %1119 = vdwg.mxu0
    %vm1120 = vcmask 1043456
    %v1121 = vsel %vm1120, %v1117, -inf
    %1122 = vmax.xlane.f32.xlu0 %v1121
    %v1123 = vpop.xlane.xlu0 %1122
    %v1124 = vsub.f32 %v1117, %v1123
    %v1125 = vmul.f32 %v1124, 1.442695
    %v1126 = vpow.pop %v1125
    %1127 = vmatpush.msra.mxu0 %v96
    %1128 = vmatpush.msra.mxu0 %v95
    %1129 = vmatpush.msra.mxu0 %v94
    %1130 = vmatpush.msra.mxu0 %v93
    %1131 = vmatpush.msra.mxu0 %v92
    %1132 = vmatpush.msra.mxu0 %v91
    %1133 = vmatpush.msra.mxu0 %v90
    %1134 = vmatpush.msra.mxu0 %v89
    %1135 = vmatpush.msra.mxu0 %v88
    %1136 = vmatpush.msra.mxu0 %v87
    %1137 = vmatpush.msra.mxu0 %v86
    %1138 = vmatpush.msra.mxu0 %v85
    %1139 = vmatpush.msra.mxu0 %v84
    %1140 = vmatpush.msra.mxu0 %v83
    %1141 = vmatpush.msra.mxu0 %v82
    %1142 = vmatpush.msra.mxu0 %v81
    %1143 = vmatmul.f32.gmra.mxu0 %v1126
    %v1144 = vpop.f32.mrf.mxu0
    %v1145 = vadd.f32 1e-30, %v1144
    %1146 = vdwg.mxu0
    %v1147 = vrcp.pop %v1145
    %v1148 = vmul.f32 %v1145, %v1147
    %v1149 = vsub.f32 1.0, %v1148
    %v1150 = vmul.f32 %v1147, %v1149
    %v1151 = vadd.f32 %v1147, %v1150
    %vm1152 = vweird.f32 %v1145
    %vm1153 = vweird.f32 %v1147
    %vm1154 = vmor %vm1152, %vm1153
    %v1155 = vsel %vm1154, %v1147, %v1151
    %v1156 = vand.u32 2147483647, %v1145
    %vm1157 = vcmp.eq.f32.partialorder %v1156, 8.507059e+37
    %v1158 = vand.u32 %v1145, 2147483648
    %v1159 = vor.u32 1.1754944e-38, %v1158
    %v1160 = vsel %vm1157, %v1159, %v1155
    %v1161 = vmul.f32 %v1126, %v1160
    %v1162 = vpack.c.bf16 %v1161, %v1161
    %1171 = vrot.lane.b32.xlu0 %v1026, 64
    %v1172 = vpop.permute.xlu0 %1171
    %1173 = vrot.lane.b32.xlu0 %v1027, 64
    %v1174 = vpop.permute.xlu0 %1173
    %1175 = vrot.lane.b32.xlu0 %v1028, 64
    %v1176 = vpop.permute.xlu0 %1175
    %1177 = vrot.lane.b32.xlu0 %v1029, 64
    %v1178 = vpop.permute.xlu0 %1177
    %1179 = vrot.lane.b32.xlu0 %v1030, 64
    %v1180 = vpop.permute.xlu0 %1179
    %1181 = vrot.lane.b32.xlu0 %v1031, 64
    %v1182 = vpop.permute.xlu0 %1181
    %1183 = vrot.lane.b32.xlu0 %v1032, 64
    %v1184 = vpop.permute.xlu0 %1183
    %1185 = vrot.lane.b32.xlu0 %v1033, 64
    %v1186 = vpop.permute.xlu0 %1185
    %1195 = vmatpush.bf16.msra.mxu0 %v1186
    %1196 = vmatpush.bf16.msra.mxu0 %v1184
    %1197 = vmatpush.bf16.msra.mxu0 %v1182
    %1198 = vmatpush.bf16.msra.mxu0 %v1180
    %1199 = vmatpush.bf16.msra.mxu0 %v1178
    %1200 = vmatpush.bf16.msra.mxu0 %v1176
    %1201 = vmatpush.bf16.msra.mxu0 %v1174
    %1202 = vmatpush.bf16.msra.mxu0 %v1172
    %1203 = vmatmul.bf16.gmra.mxu0 %v1162
    %v1204 = vpop.f32.mrf.mxu0
    %v1205 = vadd.f32 0.0, %v1204
    %v1206 = vpop.f32.mrf.mxu0
    %1207 = vdwg.mxu0
    %v1208 = vmul.f32 %v977, %v231
    %v1209 = vmul.f32 %v979, %v233
    %v1210 = vmul.f32 %v982, %v235
    %v1211 = vmul.f32 %v984, %v237
    %v1212 = vmul.f32 %v977, %v239
    %v1213 = vmul.f32 %v979, %v241
    %v1214 = vmul.f32 %v982, %v243
    %v1215 = vmul.f32 %v984, %v245
    %v1216 = vmul.f32 %v977, %v247
    %v1217 = vmul.f32 %v979, %v249
    %v1218 = vmul.f32 %v982, %v251
    %v1219 = vmul.f32 %v984, %v253
    %v1220 = vmul.f32 %v977, %v255
    %v1221 = vmul.f32 %v979, %v257
    %v1222 = vmul.f32 %v982, %v259
    %v1223 = vmul.f32 %v984, %v261
    %v1224 = vpack.c.bf16 %v1209, %v1208
    %v1225 = vpack.c.bf16 %v1211, %v1210
    %v1226 = vpack.c.bf16 %v1213, %v1212
    %v1227 = vpack.c.bf16 %v1215, %v1214
    %v1228 = vpack.c.bf16 %v1217, %v1216
    %v1229 = vpack.c.bf16 %v1219, %v1218
    %v1230 = vpack.c.bf16 %v1221, %v1220
    %v1231 = vpack.c.bf16 %v1223, %v1222
    %v1232 = vmul.f32 %v977, %v303
    %v1233 = vmul.f32 %v979, %v305
    %v1234 = vmul.f32 %v982, %v307
    %v1235 = vmul.f32 %v984, %v309
    %v1236 = vmul.f32 %v977, %v311
    %v1237 = vmul.f32 %v979, %v313
    %v1238 = vmul.f32 %v982, %v315
    %v1239 = vmul.f32 %v984, %v317
    %v1240 = vmul.f32 %v977, %v319
    %v1241 = vmul.f32 %v979, %v321
    %v1242 = vmul.f32 %v982, %v323
    %v1243 = vmul.f32 %v984, %v325
    %v1244 = vmul.f32 %v977, %v327
    %v1245 = vmul.f32 %v979, %v329
    %v1246 = vmul.f32 %v982, %v331
    %v1247 = vmul.f32 %v984, %v333
    %v1248 = vpack.c.bf16 %v1233, %v1232
    %v1249 = vpack.c.bf16 %v1235, %v1234
    %v1250 = vpack.c.bf16 %v1237, %v1236
    %v1251 = vpack.c.bf16 %v1239, %v1238
    %v1252 = vpack.c.bf16 %v1241, %v1240
    %v1253 = vpack.c.bf16 %v1243, %v1242
    %v1254 = vpack.c.bf16 %v1245, %v1244
    %v1255 = vpack.c.bf16 %v1247, %v1246
    %v1256 = vpack.c.bf16 %v977, %v977
    %v1257 = vpack.c.bf16 %v979, %v979
    %v1258 = vpack.c.bf16 %v982, %v982
    %v1259 = vpack.c.bf16 %v984, %v984
    %v1264 = vunpack.c.l.b16 %v1256
    %v1265 = vunpack.c.l.b16 %v1257
    %v1266 = vunpack.c.l.b16 %v1258
    %v1267 = vunpack.c.l.b16 %v1259
    %v1268 = vrot.slane %v1265, 7
    %v1269 = vsel %vm1047, %v1268, %v1264
    %v1270 = vrot.slane %v1266, 6
    %v1271 = vsel %vm1050, %v1270, %v1269
    %v1272 = vrot.slane %v1267, 5
    %v1273 = vsel %vm1053, %v1272, %v1271
    %v1274 = vpack.c.b16 %v1273, %v1273
    %1283 = vrot.lane.b32.xlu0 %v1224, 96
    %v1284 = vpop.permute.xlu0 %1283
    %1285 = vrot.lane.b32.xlu0 %v1225, 96
    %v1286 = vpop.permute.xlu0 %1285
    %1287 = vrot.lane.b32.xlu0 %v1226, 96
    %v1288 = vpop.permute.xlu0 %1287
    %1289 = vrot.lane.b32.xlu0 %v1227, 96
    %v1290 = vpop.permute.xlu0 %1289
    %1291 = vrot.lane.b32.xlu0 %v1228, 96
    %v1292 = vpop.permute.xlu0 %1291
    %1293 = vrot.lane.b32.xlu0 %v1229, 96
    %v1294 = vpop.permute.xlu0 %1293
    %1295 = vrot.lane.b32.xlu0 %v1230, 96
    %v1296 = vpop.permute.xlu0 %1295
    %1297 = vrot.lane.b32.xlu0 %v1231, 96
    %v1298 = vpop.permute.xlu0 %1297
    %v1300 = vsel %vm143, %v1274, 0
    %v1303 = vsel %vm143, %v1284, 0
    %v1306 = vsel %vm143, %v1286, 0
    %v1309 = vsel %vm143, %v1288, 0
    %v1312 = vsel %vm143, %v1290, 0
    %v1315 = vsel %vm143, %v1292, 0
    %v1318 = vsel %vm143, %v1294, 0
    %v1321 = vsel %vm143, %v1296, 0
    %v1324 = vsel %vm143, %v1298, 0
    %1326 = vmatpush.bf16.xpose.msra.mxu0 %v1324
    %1327 = vmatpush.bf16.xpose.msra.mxu0 %v1321
    %1328 = vmatpush.bf16.xpose.msra.mxu0 %v1318
    %1329 = vmatpush.bf16.xpose.msra.mxu0 %v1315
    %1330 = vmatpush.bf16.xpose.msra.mxu0 %v1312
    %1331 = vmatpush.bf16.xpose.msra.mxu0 %v1309
    %1332 = vmatpush.bf16.xpose.msra.mxu0 %v1306
    %1333 = vmatpush.bf16.xpose.msra.mxu0 %v1303
    %1334 = vmatmul.bf16.gmra.mxu0 %v1300
    %v1335 = vpop.f32.mrf.mxu0
    %v1336 = vadd.f32 %v101, %v1335
    %v1337 = vpop.f32.mrf.mxu0
    %1338 = vdwg.mxu0
    %v1339 = vsel %vm1120, %v1336, -inf
    %1340 = vmax.xlane.f32.xlu0 %v1339
    %v1341 = vpop.xlane.xlu0 %1340
    %v1342 = vsub.f32 %v1336, %v1341
    %v1343 = vmul.f32 %v1342, 1.442695
    %v1344 = vpow.pop %v1343
    %1345 = vmatpush.msra.mxu0 %v96
    %1346 = vmatpush.msra.mxu0 %v95
    %1347 = vmatpush.msra.mxu0 %v94
    %1348 = vmatpush.msra.mxu0 %v93
    %1349 = vmatpush.msra.mxu0 %v92
    %1350 = vmatpush.msra.mxu0 %v91
    %1351 = vmatpush.msra.mxu0 %v90
    %1352 = vmatpush.msra.mxu0 %v89
    %1353 = vmatpush.msra.mxu0 %v88
    %1354 = vmatpush.msra.mxu0 %v87
    %1355 = vmatpush.msra.mxu0 %v86
    %1356 = vmatpush.msra.mxu0 %v85
    %1357 = vmatpush.msra.mxu0 %v84
    %1358 = vmatpush.msra.mxu0 %v83
    %1359 = vmatpush.msra.mxu0 %v82
    %1360 = vmatpush.msra.mxu0 %v81
    %1361 = vmatmul.f32.gmra.mxu0 %v1344
    %v1362 = vpop.f32.mrf.mxu0
    %v1363 = vadd.f32 1e-30, %v1362
    %1364 = vdwg.mxu0
    %v1365 = vrcp.pop %v1363
    %v1366 = vmul.f32 %v1363, %v1365
    %v1367 = vsub.f32 1.0, %v1366
    %v1368 = vmul.f32 %v1365, %v1367
    %v1369 = vadd.f32 %v1365, %v1368
    %vm1370 = vweird.f32 %v1363
    %vm1371 = vweird.f32 %v1365
    %vm1372 = vmor %vm1370, %vm1371
    %v1373 = vsel %vm1372, %v1365, %v1369
    %v1374 = vand.u32 2147483647, %v1363
    %vm1375 = vcmp.eq.f32.partialorder %v1374, 8.507059e+37
    %v1376 = vand.u32 %v1363, 2147483648
    %v1377 = vor.u32 1.1754944e-38, %v1376
    %v1378 = vsel %vm1375, %v1377, %v1373
    %v1379 = vmul.f32 %v1344, %v1378
    %v1380 = vpack.c.bf16 %v1379, %v1379
    %1389 = vrot.lane.b32.xlu0 %v1248, 64
    %v1390 = vpop.permute.xlu0 %1389
    %1391 = vrot.lane.b32.xlu0 %v1249, 64
    %v1392 = vpop.permute.xlu0 %1391
    %1393 = vrot.lane.b32.xlu0 %v1250, 64
    %v1394 = vpop.permute.xlu0 %1393
    %1395 = vrot.lane.b32.xlu0 %v1251, 64
    %v1396 = vpop.permute.xlu0 %1395
    %1397 = vrot.lane.b32.xlu0 %v1252, 64
    %v1398 = vpop.permute.xlu0 %1397
    %1399 = vrot.lane.b32.xlu0 %v1253, 64
    %v1400 = vpop.permute.xlu0 %1399
    %1401 = vrot.lane.b32.xlu0 %v1254, 64
    %v1402 = vpop.permute.xlu0 %1401
    %1403 = vrot.lane.b32.xlu0 %v1255, 64
    %v1404 = vpop.permute.xlu0 %1403
    %1413 = vmatpush.bf16.msra.mxu0 %v1404
    %1414 = vmatpush.bf16.msra.mxu0 %v1402
    %1415 = vmatpush.bf16.msra.mxu0 %v1400
    %1416 = vmatpush.bf16.msra.mxu0 %v1398
    %1417 = vmatpush.bf16.msra.mxu0 %v1396
    %1418 = vmatpush.bf16.msra.mxu0 %v1394
    %1419 = vmatpush.bf16.msra.mxu0 %v1392
    %1420 = vmatpush.bf16.msra.mxu0 %v1390
    %1421 = vmatmul.bf16.gmra.mxu0 %v1380
    %v1422 = vpop.f32.mrf.mxu0
    %v1423 = vadd.f32 0.0, %v1422
    %v1424 = vpop.f32.mrf.mxu0
    %1425 = vdwg.mxu0
    %v1427 = vrot.slane %v1423, 4
    %v1429 = vsel %vm1120, %v1205, %v1427
    %v1434 = vrot.slane %v58, 7
    %v1435 = vsel %vm1047, %v1434, %v57
    %v1436 = vrot.slane %v59, 6
    %v1437 = vsel %vm1050, %v1436, %v1435
    %v1438 = vrot.slane %v60, 5
    %v1439 = vsel %vm1053, %v1438, %v1437
    %v1445 = vrot.slane %v61, 4
    %v1446 = vrot.slane %v62, 3
    %vm1447 = vcmask 1045509
    %v1448 = vsel %vm1447, %v1446, %v1445
    %v1449 = vrot.slane %v63, 2
    %vm1450 = vcmask 1046534
    %v1451 = vsel %vm1450, %v1449, %v1448
    %v1452 = vrot.slane %v64, 1
    %vm1453 = vcmask 1047559
    %v1454 = vsel %vm1453, %v1452, %v1451
    %v1456 = vsel %vm1120, %v1439, %v1454
    %v1457 = vld [vmem:[#allocation5 + $0x80] sm:$0x11]
    %v1458 = vld [vmem:[#allocation5 + $0x88] sm:$0x11]
    %v1459 = vunpack.c.l.bf16 %v1457
    %v1460 = vunpack.c.h.bf16 %v1457
    %v1461 = vunpack.c.l.bf16 %v1458
    %v1462 = vunpack.c.h.bf16 %v1458
    %v1463 = vpack.c.bf16 %v1429, %v1429
    %v1464 = vld [vmem:[#allocation5] sm:$0xff]
    %v1465 = vld [vmem:[#allocation5 + $0x8] sm:$0xff]
    %v1466 = vld [vmem:[#allocation5 + $0x10] sm:$0xff]
    %v1467 = vld [vmem:[#allocation5 + $0x18] sm:$0xff]
    %v1468 = vld [vmem:[#allocation5 + $0x20] sm:$0xff]
    %v1469 = vld [vmem:[#allocation5 + $0x28] sm:$0xff]
    %v1470 = vld [vmem:[#allocation5 + $0x30] sm:$0xff]
    %v1471 = vld [vmem:[#allocation5 + $0x38] sm:$0xff]
    %v1472 = vpack.c.bf16 %v1456, %v1456
    %v1473 = vld [vmem:[#allocation5 + $0x40] sm:$0xff]
    %v1474 = vld [vmem:[#allocation5 + $0x48] sm:$0xff]
    %v1475 = vld [vmem:[#allocation5 + $0x50] sm:$0xff]
    %v1476 = vld [vmem:[#allocation5 + $0x58] sm:$0xff]
    %v1477 = vld [vmem:[#allocation5 + $0x60] sm:$0xff]
    %v1478 = vld [vmem:[#allocation5 + $0x68] sm:$0xff]
    %v1479 = vld [vmem:[#allocation5 + $0x70] sm:$0xff]
    %v1480 = vld [vmem:[#allocation5 + $0x78] sm:$0xff]
    %v1489 = vunpack.c.l.b16 %v1473
    %v1490 = vunpack.c.h.b16 %v1473
    %v1491 = vunpack.c.l.b16 %v1474
    %v1492 = vunpack.c.h.b16 %v1474
    %v1493 = vunpack.c.l.b16 %v1475
    %v1494 = vunpack.c.h.b16 %v1475
    %v1495 = vunpack.c.l.b16 %v1476
    %v1496 = vunpack.c.h.b16 %v1476
    %v1497 = vunpack.c.l.b16 %v1477
    %v1498 = vunpack.c.h.b16 %v1477
    %v1499 = vunpack.c.l.b16 %v1478
    %v1500 = vunpack.c.h.b16 %v1478
    %v1501 = vunpack.c.l.b16 %v1479
    %v1502 = vunpack.c.h.b16 %v1479
    %v1503 = vunpack.c.l.b16 %v1480
    %v1504 = vunpack.c.h.b16 %v1480
    %v1505 = vpack.c.b16 %v1493, %v1489
    %v1506 = vpack.c.b16 %v1494, %v1490
    %v1507 = vpack.c.b16 %v1495, %v1491
    %v1508 = vpack.c.b16 %v1496, %v1492
    %v1509 = vpack.c.b16 %v1501, %v1497
    %v1510 = vpack.c.b16 %v1502, %v1498
    %v1511 = vpack.c.b16 %v1503, %v1499
    %v1512 = vpack.c.b16 %v1504, %v1500
    %v1522 = vsel %vm143, %v1472, 0
    %1524 = vmatpush.bf16.msra.mxu0 0
    %1525 = vmatpush.bf16.msra.mxu0 0
    %1526 = vmatpush.bf16.msra.mxu0 0
    %1527 = vmatpush.bf16.msra.mxu0 0
    %1528 = vmatpush.bf16.msra.mxu0 0
    %1529 = vmatpush.bf16.msra.mxu0 0
    %1530 = vmatpush.bf16.msra.mxu0 %v1509
    %1531 = vmatpush.bf16.msra.mxu0 %v1505
    %1532 = vmatmul.bf16.gmra.mxu0 %v1522
    %v1533 = vpop.f32.mrf.mxu0
    %v1534 = vadd.f32 0.0, %v1533
    %v1535 = vpop.f32.mrf.mxu0
    %1536 = vdwg.mxu0
    %1537 = vmatpush.bf16.msra.mxu0 0
    %1538 = vmatpush.bf16.msra.mxu0 0
    %1539 = vmatpush.bf16.msra.mxu0 0
    %1540 = vmatpush.bf16.msra.mxu0 0
    %1541 = vmatpush.bf16.msra.mxu0 0
    %1542 = vmatpush.bf16.msra.mxu0 0
    %1543 = vmatpush.bf16.msra.mxu0 %v1510
    %1544 = vmatpush.bf16.msra.mxu0 %v1506
    %1545 = vmatmul.bf16.gmra.mxu0 %v1522
    %v1546 = vpop.f32.mrf.mxu0
    %v1547 = vadd.f32 0.0, %v1546
    %v1548 = vpop.f32.mrf.mxu0
    %1549 = vdwg.mxu0
    %1550 = vmatpush.bf16.msra.mxu0 0
    %1551 = vmatpush.bf16.msra.mxu0 0
    %1552 = vmatpush.bf16.msra.mxu0 0
    %1553 = vmatpush.bf16.msra.mxu0 0
    %1554 = vmatpush.bf16.msra.mxu0 0
    %1555 = vmatpush.bf16.msra.mxu0 0
    %1556 = vmatpush.bf16.msra.mxu0 %v1511
    %1557 = vmatpush.bf16.msra.mxu0 %v1507
    %1558 = vmatmul.bf16.gmra.mxu0 %v1522
    %v1559 = vpop.f32.mrf.mxu0
    %v1560 = vadd.f32 0.0, %v1559
    %v1561 = vpop.f32.mrf.mxu0
    %1562 = vdwg.mxu0
    %1563 = vmatpush.bf16.msra.mxu0 0
    %1564 = vmatpush.bf16.msra.mxu0 0
    %1565 = vmatpush.bf16.msra.mxu0 0
    %1566 = vmatpush.bf16.msra.mxu0 0
    %1567 = vmatpush.bf16.msra.mxu0 0
    %1568 = vmatpush.bf16.msra.mxu0 0
    %1569 = vmatpush.bf16.msra.mxu0 %v1512
    %1570 = vmatpush.bf16.msra.mxu0 %v1508
    %1571 = vmatmul.bf16.gmra.mxu0 %v1522
    %v1572 = vpop.f32.mrf.mxu0
    %v1573 = vadd.f32 0.0, %v1572
    %v1574 = vpop.f32.mrf.mxu0
    %1575 = vdwg.mxu0
    %v1584 = vunpack.c.l.b16 %v1464
    %v1585 = vunpack.c.h.b16 %v1464
    %v1586 = vunpack.c.l.b16 %v1465
    %v1587 = vunpack.c.h.b16 %v1465
    %v1588 = vunpack.c.l.b16 %v1466
    %v1589 = vunpack.c.h.b16 %v1466
    %v1590 = vunpack.c.l.b16 %v1467
    %v1591 = vunpack.c.h.b16 %v1467
    %v1592 = vunpack.c.l.b16 %v1468
    %v1593 = vunpack.c.h.b16 %v1468
    %v1594 = vunpack.c.l.b16 %v1469
    %v1595 = vunpack.c.h.b16 %v1469
    %v1596 = vunpack.c.l.b16 %v1470
    %v1597 = vunpack.c.h.b16 %v1470
    %v1598 = vunpack.c.l.b16 %v1471
    %v1599 = vunpack.c.h.b16 %v1471
    %v1600 = vpack.c.b16 %v1588, %v1584
    %v1601 = vpack.c.b16 %v1589, %v1585
    %v1602 = vpack.c.b16 %v1590, %v1586
    %v1603 = vpack.c.b16 %v1591, %v1587
    %v1604 = vpack.c.b16 %v1596, %v1592
    %v1605 = vpack.c.b16 %v1597, %v1593
    %v1606 = vpack.c.b16 %v1598, %v1594
    %v1607 = vpack.c.b16 %v1599, %v1595
    %v1617 = vsel %vm143, %v1463, 0
    %1619 = vmatpush.bf16.msra.mxu0 0
    %1620 = vmatpush.bf16.msra.mxu0 0
    %1621 = vmatpush.bf16.msra.mxu0 0
    %1622 = vmatpush.bf16.msra.mxu0 0
    %1623 = vmatpush.bf16.msra.mxu0 0
    %1624 = vmatpush.bf16.msra.mxu0 0
    %1625 = vmatpush.bf16.msra.mxu0 %v1604
    %1626 = vmatpush.bf16.msra.mxu0 %v1600
    %1627 = vmatmul.bf16.gmra.mxu0 %v1617
    %v1628 = vpop.f32.mrf.mxu0
    %v1629 = vadd.f32 %v1534, %v1628
    %v1630 = vpop.f32.mrf.mxu0
    %1631 = vdwg.mxu0
    %1632 = vmatpush.bf16.msra.mxu0 0
    %1633 = vmatpush.bf16.msra.mxu0 0
    %1634 = vmatpush.bf16.msra.mxu0 0
    %1635 = vmatpush.bf16.msra.mxu0 0
    %1636 = vmatpush.bf16.msra.mxu0 0
    %1637 = vmatpush.bf16.msra.mxu0 0
    %1638 = vmatpush.bf16.msra.mxu0 %v1605
    %1639 = vmatpush.bf16.msra.mxu0 %v1601
    %1640 = vmatmul.bf16.gmra.mxu0 %v1617
    %v1641 = vpop.f32.mrf.mxu0
    %v1642 = vadd.f32 %v1547, %v1641
    %v1643 = vpop.f32.mrf.mxu0
    %1644 = vdwg.mxu0
    %1645 = vmatpush.bf16.msra.mxu0 0
    %1646 = vmatpush.bf16.msra.mxu0 0
    %1647 = vmatpush.bf16.msra.mxu0 0
    %1648 = vmatpush.bf16.msra.mxu0 0
    %1649 = vmatpush.bf16.msra.mxu0 0
    %1650 = vmatpush.bf16.msra.mxu0 0
    %1651 = vmatpush.bf16.msra.mxu0 %v1606
    %1652 = vmatpush.bf16.msra.mxu0 %v1602
    %1653 = vmatmul.bf16.gmra.mxu0 %v1617
    %v1654 = vpop.f32.mrf.mxu0
    %v1655 = vadd.f32 %v1560, %v1654
    %v1656 = vpop.f32.mrf.mxu0
    %1657 = vdwg.mxu0
    %1658 = vmatpush.bf16.msra.mxu0 0
    %1659 = vmatpush.bf16.msra.mxu0 0
    %1660 = vmatpush.bf16.msra.mxu0 0
    %1661 = vmatpush.bf16.msra.mxu0 0
    %1662 = vmatpush.bf16.msra.mxu0 0
    %1663 = vmatpush.bf16.msra.mxu0 0
    %1664 = vmatpush.bf16.msra.mxu0 %v1607
    %1665 = vmatpush.bf16.msra.mxu0 %v1603
    %1666 = vmatmul.bf16.gmra.mxu0 %v1617
    %v1667 = vpop.f32.mrf.mxu0
    %v1668 = vadd.f32 %v1573, %v1667
    %v1669 = vpop.f32.mrf.mxu0
    %1670 = vdwg.mxu0
    %v1671 = vperm.slane %v1459, 0
    %v1672 = vperm.slane %v1460, 0
    %v1673 = vperm.slane %v1461, 0
    %v1674 = vperm.slane %v1462, 0
    %v1675 = vadd.f32 %v1629, %v1671
    %v1676 = vadd.f32 %v1642, %v1672
    %v1677 = vadd.f32 %v1655, %v1673
    %v1678 = vadd.f32 %v1668, %v1674
    %v1679 = vmul.f32 %v1675, 0.5
    %v1680 = vmul.f32 %v1676, 0.5
    %v1681 = vmul.f32 %v1677, 0.5
    %v1682 = vmul.f32 %v1678, 0.5
    %v1683 = vmul.f32 %v1675, 0.70710677
    %v1684 = vmul.f32 %v1676, 0.70710677
    %v1685 = vmul.f32 %v1677, 0.70710677
    %v1686 = vmul.f32 %v1678, 0.70710677
    %vm1687 = vcmp.lt.f32.partialorder %v1683, 0.0
    %vm1688 = vcmp.lt.f32.partialorder %v1684, 0.0
    %vm1689 = vcmp.lt.f32.partialorder %v1685, 0.0
    %vm1690 = vcmp.lt.f32.partialorder %v1686, 0.0
    %v1691 = vsel %vm1687, -1.0, 1.0
    %v1692 = vsel %vm1688, -1.0, 1.0
    %v1693 = vsel %vm1689, -1.0, 1.0
    %v1694 = vsel %vm1690, -1.0, 1.0
    %v1695 = vand.u32 2147483647, %v1683
    %v1696 = vand.u32 2147483647, %v1684
    %v1697 = vand.u32 2147483647, %v1685
    %v1698 = vand.u32 2147483647, %v1686
    %v1699 = vmul.f32 %v1695, 0.3275911
    %v1700 = vmul.f32 %v1696, 0.3275911
    %v1701 = vmul.f32 %v1697, 0.3275911
    %v1702 = vmul.f32 %v1698, 0.3275911
    %v1703 = vadd.f32 %v1699, 1.0
    %v1704 = vadd.f32 %v1700, 1.0
    %v1705 = vadd.f32 %v1701, 1.0
    %v1706 = vadd.f32 %v1702, 1.0
    %v1707 = vrcp.pop %v1703
    %v1708 = vmul.f32 %v1703, %v1707
    %v1709 = vsub.f32 1.0, %v1708
    %v1710 = vmul.f32 %v1707, %v1709
    %v1711 = vadd.f32 %v1707, %v1710
    %vm1712 = vweird.f32 %v1703
    %vm1713 = vweird.f32 %v1707
    %vm1714 = vmor %vm1712, %vm1713
    %v1715 = vsel %vm1714, %v1707, %v1711
    %v1716 = vand.u32 2147483647, %v1703
    %vm1717 = vcmp.eq.f32.partialorder %v1716, 8.507059e+37
    %v1718 = vand.u32 %v1703, 2147483648
    %v1719 = vor.u32 1.1754944e-38, %v1718
    %v1720 = vsel %vm1717, %v1719, %v1715
    %v1721 = vmul.f32 1.0, %v1720
    %v1722 = vrcp.pop %v1704
    %v1723 = vmul.f32 %v1704, %v1722
    %v1724 = vsub.f32 1.0, %v1723
    %v1725 = vmul.f32 %v1722, %v1724
    %v1726 = vadd.f32 %v1722, %v1725
    %vm1727 = vweird.f32 %v1704
    %vm1728 = vweird.f32 %v1722
    %vm1729 = vmor %vm1727, %vm1728
    %v1730 = vsel %vm1729, %v1722, %v1726
    %v1731 = vand.u32 2147483647, %v1704
    %vm1732 = vcmp.eq.f32.partialorder %v1731, 8.507059e+37
    %v1733 = vand.u32 %v1704, 2147483648
    %v1734 = vor.u32 1.1754944e-38, %v1733
    %v1735 = vsel %vm1732, %v1734, %v1730
    %v1736 = vmul.f32 1.0, %v1735
    %v1737 = vrcp.pop %v1705
    %v1738 = vmul.f32 %v1705, %v1737
    %v1739 = vsub.f32 1.0, %v1738
    %v1740 = vmul.f32 %v1737, %v1739
    %v1741 = vadd.f32 %v1737, %v1740
    %vm1742 = vweird.f32 %v1705
    %vm1743 = vweird.f32 %v1737
    %vm1744 = vmor %vm1742, %vm1743
    %v1745 = vsel %vm1744, %v1737, %v1741
    %v1746 = vand.u32 2147483647, %v1705
    %vm1747 = vcmp.eq.f32.partialorder %v1746, 8.507059e+37
    %v1748 = vand.u32 %v1705, 2147483648
    %v1749 = vor.u32 1.1754944e-38, %v1748
    %v1750 = vsel %vm1747, %v1749, %v1745
    %v1751 = vmul.f32 1.0, %v1750
    %v1752 = vrcp.pop %v1706
    %v1753 = vmul.f32 %v1706, %v1752
    %v1754 = vsub.f32 1.0, %v1753
    %v1755 = vmul.f32 %v1752, %v1754
    %v1756 = vadd.f32 %v1752, %v1755
    %vm1757 = vweird.f32 %v1706
    %vm1758 = vweird.f32 %v1752
    %vm1759 = vmor %vm1757, %vm1758
    %v1760 = vsel %vm1759, %v1752, %v1756
    %v1761 = vand.u32 2147483647, %v1706
    %vm1762 = vcmp.eq.f32.partialorder %v1761, 8.507059e+37
    %v1763 = vand.u32 %v1706, 2147483648
    %v1764 = vor.u32 1.1754944e-38, %v1763
    %v1765 = vsel %vm1762, %v1764, %v1760
    %v1766 = vmul.f32 1.0, %v1765
    %v1767 = vmul.f32 %v1721, 1.0614054
    %v1768 = vmul.f32 %v1736, 1.0614054
    %v1769 = vmul.f32 %v1751, 1.0614054
    %v1770 = vmul.f32 %v1766, 1.0614054
    %v1771 = vadd.f32 %v1767, -1.4531521
    %v1772 = vadd.f32 %v1768, -1.4531521
    %v1773 = vadd.f32 %v1769, -1.4531521
    %v1774 = vadd.f32 %v1770, -1.4531521
    %v1775 = vmul.f32 %v1721, %v1771
    %v1776 = vmul.f32 %v1736, %v1772
    %v1777 = vmul.f32 %v1751, %v1773
    %v1778 = vmul.f32 %v1766, %v1774
    %v1779 = vadd.f32 %v1775, 1.4214138
    %v1780 = vadd.f32 %v1776, 1.4214138
    %v1781 = vadd.f32 %v1777, 1.4214138
    %v1782 = vadd.f32 %v1778, 1.4214138
    %v1783 = vmul.f32 %v1721, %v1779
    %v1784 = vmul.f32 %v1736, %v1780
    %v1785 = vmul.f32 %v1751, %v1781
    %v1786 = vmul.f32 %v1766, %v1782
    %v1787 = vadd.f32 %v1783, -0.28449672
    %v1788 = vadd.f32 %v1784, -0.28449672
    %v1789 = vadd.f32 %v1785, -0.28449672
    %v1790 = vadd.f32 %v1786, -0.28449672
    %v1791 = vmul.f32 %v1721, %v1787
    %v1792 = vmul.f32 %v1736, %v1788
    %v1793 = vmul.f32 %v1751, %v1789
    %v1794 = vmul.f32 %v1766, %v1790
    %v1795 = vadd.f32 %v1791, 0.2548296
    %v1796 = vadd.f32 %v1792, 0.2548296
    %v1797 = vadd.f32 %v1793, 0.2548296
    %v1798 = vadd.f32 %v1794, 0.2548296
    %v1799 = vmul.f32 %v1721, %v1795
    %v1800 = vmul.f32 %v1736, %v1796
    %v1801 = vmul.f32 %v1751, %v1797
    %v1802 = vmul.f32 %v1766, %v1798
    %v1803 = vsub.f32 0.0, %v1695
    %v1804 = vsub.f32 0.0, %v1696
    %v1805 = vsub.f32 0.0, %v1697
    %v1806 = vsub.f32 0.0, %v1698
    %v1807 = vmul.f32 %v1803, %v1695
    %v1808 = vmul.f32 %v1804, %v1696
    %v1809 = vmul.f32 %v1805, %v1697
    %v1810 = vmul.f32 %v1806, %v1698
    %v1811 = vmul.f32 %v1807, 1.442695
    %v1812 = vpow.pop %v1811
    %v1813 = vmul.f32 %v1808, 1.442695
    %v1814 = vpow.pop %v1813
    %v1815 = vmul.f32 %v1809, 1.442695
    %v1816 = vpow.pop %v1815
    %v1817 = vmul.f32 %v1810, 1.442695
    %v1818 = vpow.pop %v1817
    %v1819 = vmul.f32 %v1799, %v1812
    %v1820 = vmul.f32 %v1800, %v1814
    %v1821 = vmul.f32 %v1801, %v1816
    %v1822 = vmul.f32 %v1802, %v1818
    %v1823 = vsub.f32 1.0, %v1819
    %v1824 = vsub.f32 1.0, %v1820
    %v1825 = vsub.f32 1.0, %v1821
    %v1826 = vsub.f32 1.0, %v1822
    %v1827 = vmul.f32 %v1691, %v1823
    %v1828 = vmul.f32 %v1692, %v1824
    %v1829 = vmul.f32 %v1693, %v1825
    %v1830 = vmul.f32 %v1694, %v1826
    %v1831 = vadd.f32 %v1827, 1.0
    %v1832 = vadd.f32 %v1828, 1.0
    %v1833 = vadd.f32 %v1829, 1.0
    %v1834 = vadd.f32 %v1830, 1.0
    %v1835 = vmul.f32 %v1679, %v1831
    %v1836 = vmul.f32 %v1680, %v1832
    %v1837 = vmul.f32 %v1681, %v1833
    %v1838 = vmul.f32 %v1682, %v1834
    %v1839 = vpack.c.bf16 %v1835, %v1835
    %v1840 = vpack.c.bf16 %v1836, %v1836
    %v1841 = vpack.c.bf16 %v1837, %v1837
    %v1842 = vpack.c.bf16 %v1838, %v1838
    %v1843 = vld [vmem:[%s4] sm:$0xf]
    %v1844 = vld [vmem:[%s4 + $0x4] sm:$0xf]
    %v1845 = vld [vmem:[%s4 + $0x8] sm:$0xf]
    %v1846 = vld [vmem:[%s4 + $0xc] sm:$0xf]
    %v1847 = vld [vmem:[%s4 + $0x10] sm:$0xf]
    %v1848 = vld [vmem:[%s4 + $0x14] sm:$0xf]
    %v1849 = vld [vmem:[%s4 + $0x18] sm:$0xf]
    %v1850 = vld [vmem:[%s4 + $0x1c] sm:$0xf]
    %v1851 = vld [vmem:[%s4 + $0x20] sm:$0xf]
    %v1852 = vld [vmem:[%s4 + $0x24] sm:$0xf]
    %v1853 = vld [vmem:[%s4 + $0x28] sm:$0xf]
    %v1854 = vld [vmem:[%s4 + $0x2c] sm:$0xf]
    %v1855 = vld [vmem:[%s4 + $0x30] sm:$0xf]
    %v1856 = vld [vmem:[%s4 + $0x34] sm:$0xf]
    %v1857 = vld [vmem:[%s4 + $0x38] sm:$0xf]
    %v1858 = vld [vmem:[%s4 + $0x3c] sm:$0xf]
    %v1859 = vld [vmem:[%s4 + $0x40] sm:$0xf]
    %v1860 = vld [vmem:[%s4 + $0x44] sm:$0xf]
    %v1861 = vld [vmem:[%s4 + $0x48] sm:$0xf]
    %v1862 = vld [vmem:[%s4 + $0x4c] sm:$0xf]
    %v1863 = vld [vmem:[%s4 + $0x50] sm:$0xf]
    %v1864 = vld [vmem:[%s4 + $0x54] sm:$0xf]
    %v1865 = vld [vmem:[%s4 + $0x58] sm:$0xf]
    %v1866 = vld [vmem:[%s4 + $0x5c] sm:$0xf]
    %v1867 = vld [vmem:[%s4 + $0x60] sm:$0xf]
    %v1868 = vld [vmem:[%s4 + $0x64] sm:$0xf]
    %v1869 = vld [vmem:[%s4 + $0x68] sm:$0xf]
    %v1870 = vld [vmem:[%s4 + $0x6c] sm:$0xf]
    %v1871 = vld [vmem:[%s4 + $0x70] sm:$0xf]
    %v1872 = vld [vmem:[%s4 + $0x74] sm:$0xf]
    %v1873 = vld [vmem:[%s4 + $0x78] sm:$0xf]
    %v1874 = vld [vmem:[%s4 + $0x7c] sm:$0xf]
    %v1875 = vld [vmem:[%s4 + $0x80] sm:$0xf]
    %v1876 = vld [vmem:[%s4 + $0x84] sm:$0xf]
    %v1877 = vld [vmem:[%s4 + $0x88] sm:$0xf]
    %v1878 = vld [vmem:[%s4 + $0x8c] sm:$0xf]
    %v1879 = vld [vmem:[%s4 + $0x90] sm:$0xf]
    %v1880 = vld [vmem:[%s4 + $0x94] sm:$0xf]
    %v1881 = vld [vmem:[%s4 + $0x98] sm:$0xf]
    %v1882 = vld [vmem:[%s4 + $0x9c] sm:$0xf]
    %v1883 = vld [vmem:[%s4 + $0xa0] sm:$0xf]
    %v1884 = vld [vmem:[%s4 + $0xa4] sm:$0xf]
    %v1885 = vld [vmem:[%s4 + $0xa8] sm:$0xf]
    %v1886 = vld [vmem:[%s4 + $0xac] sm:$0xf]
    %v1887 = vld [vmem:[%s4 + $0xb0] sm:$0xf]
    %v1888 = vld [vmem:[%s4 + $0xb4] sm:$0xf]
    %v1889 = vld [vmem:[%s4 + $0xb8] sm:$0xf]
    %v1890 = vld [vmem:[%s4 + $0xbc] sm:$0xf]
    %v1891 = vld [vmem:[%s4 + $0xc0] sm:$0xf]
    %v1892 = vld [vmem:[%s4 + $0xc4] sm:$0xf]
    %v1893 = vld [vmem:[%s4 + $0xc8] sm:$0xf]
    %v1894 = vld [vmem:[%s4 + $0xcc] sm:$0xf]
    %v1895 = vld [vmem:[%s4 + $0xd0] sm:$0xf]
    %v1896 = vld [vmem:[%s4 + $0xd4] sm:$0xf]
    %v1897 = vld [vmem:[%s4 + $0xd8] sm:$0xf]
    %v1898 = vld [vmem:[%s4 + $0xdc] sm:$0xf]
    %v1899 = vld [vmem:[%s4 + $0xe0] sm:$0xf]
    %v1900 = vld [vmem:[%s4 + $0xe4] sm:$0xf]
    %v1901 = vld [vmem:[%s4 + $0xe8] sm:$0xf]
    %v1902 = vld [vmem:[%s4 + $0xec] sm:$0xf]
    %v1903 = vld [vmem:[%s4 + $0xf0] sm:$0xf]
    %v1904 = vld [vmem:[%s4 + $0xf4] sm:$0xf]
    %v1905 = vld [vmem:[%s4 + $0xf8] sm:$0xf]
    %v1906 = vld [vmem:[%s4 + $0xfc] sm:$0xf]
    %v1907 = vld [vmem:[%s5 + $0x20] sm:$0x1]
    %v1908 = vperm.slane %v1907, 0
    %v1973 = vunpack.c.l.b16 %v1843
    %v1974 = vunpack.c.l.b16 %v1844
    %v1975 = vunpack.c.l.b16 %v1845
    %v1976 = vunpack.c.l.b16 %v1846
    %v1977 = vunpack.c.l.b16 %v1847
    %v1978 = vunpack.c.l.b16 %v1848
    %v1979 = vunpack.c.l.b16 %v1849
    %v1980 = vunpack.c.l.b16 %v1850
    %v1981 = vunpack.c.l.b16 %v1851
    %v1982 = vunpack.c.l.b16 %v1852
    %v1983 = vunpack.c.l.b16 %v1853
    %v1984 = vunpack.c.l.b16 %v1854
    %v1985 = vunpack.c.l.b16 %v1855
    %v1986 = vunpack.c.l.b16 %v1856
    %v1987 = vunpack.c.l.b16 %v1857
    %v1988 = vunpack.c.l.b16 %v1858
    %v1989 = vunpack.c.l.b16 %v1859
    %v1990 = vunpack.c.l.b16 %v1860
    %v1991 = vunpack.c.l.b16 %v1861
    %v1992 = vunpack.c.l.b16 %v1862
    %v1993 = vunpack.c.l.b16 %v1863
    %v1994 = vunpack.c.l.b16 %v1864
    %v1995 = vunpack.c.l.b16 %v1865
    %v1996 = vunpack.c.l.b16 %v1866
    %v1997 = vunpack.c.l.b16 %v1867
    %v1998 = vunpack.c.l.b16 %v1868
    %v1999 = vunpack.c.l.b16 %v1869
    %v2000 = vunpack.c.l.b16 %v1870
    %v2001 = vunpack.c.l.b16 %v1871
    %v2002 = vunpack.c.l.b16 %v1872
    %v2003 = vunpack.c.l.b16 %v1873
    %v2004 = vunpack.c.l.b16 %v1874
    %v2005 = vunpack.c.l.b16 %v1875
    %v2006 = vunpack.c.l.b16 %v1876
    %v2007 = vunpack.c.l.b16 %v1877
    %v2008 = vunpack.c.l.b16 %v1878
    %v2009 = vunpack.c.l.b16 %v1879
    %v2010 = vunpack.c.l.b16 %v1880
    %v2011 = vunpack.c.l.b16 %v1881
    %v2012 = vunpack.c.l.b16 %v1882
    %v2013 = vunpack.c.l.b16 %v1883
    %v2014 = vunpack.c.l.b16 %v1884
    %v2015 = vunpack.c.l.b16 %v1885
    %v2016 = vunpack.c.l.b16 %v1886
    %v2017 = vunpack.c.l.b16 %v1887
    %v2018 = vunpack.c.l.b16 %v1888
    %v2019 = vunpack.c.l.b16 %v1889
    %v2020 = vunpack.c.l.b16 %v1890
    %v2021 = vunpack.c.l.b16 %v1891
    %v2022 = vunpack.c.l.b16 %v1892
    %v2023 = vunpack.c.l.b16 %v1893
    %v2024 = vunpack.c.l.b16 %v1894
    %v2025 = vunpack.c.l.b16 %v1895
    %v2026 = vunpack.c.l.b16 %v1896
    %v2027 = vunpack.c.l.b16 %v1897
    %v2028 = vunpack.c.l.b16 %v1898
    %v2029 = vunpack.c.l.b16 %v1899
    %v2030 = vunpack.c.l.b16 %v1900
    %v2031 = vunpack.c.l.b16 %v1901
    %v2032 = vunpack.c.l.b16 %v1902
    %v2033 = vunpack.c.l.b16 %v1903
    %v2034 = vunpack.c.l.b16 %v1904
    %v2035 = vunpack.c.l.b16 %v1905
    %v2036 = vunpack.c.l.b16 %v1906
    %v2037 = vpack.c.b16 %v1974, %v1973
    %v2038 = vpack.c.b16 %v1976, %v1975
    %v2039 = vpack.c.b16 %v1978, %v1977
    %v2040 = vpack.c.b16 %v1980, %v1979
    %v2041 = vpack.c.b16 %v1982, %v1981
    %v2042 = vpack.c.b16 %v1984, %v1983
    %v2043 = vpack.c.b16 %v1986, %v1985
    %v2044 = vpack.c.b16 %v1988, %v1987
    %v2045 = vpack.c.b16 %v1990, %v1989
    %v2046 = vpack.c.b16 %v1992, %v1991
    %v2047 = vpack.c.b16 %v1994, %v1993
    %v2048 = vpack.c.b16 %v1996, %v1995
    %v2049 = vpack.c.b16 %v1998, %v1997
    %v2050 = vpack.c.b16 %v2000, %v1999
    %v2051 = vpack.c.b16 %v2002, %v2001
    %v2052 = vpack.c.b16 %v2004, %v2003
    %v2053 = vpack.c.b16 %v2006, %v2005
    %v2054 = vpack.c.b16 %v2008, %v2007
    %v2055 = vpack.c.b16 %v2010, %v2009
    %v2056 = vpack.c.b16 %v2012, %v2011
    %v2057 = vpack.c.b16 %v2014, %v2013
    %v2058 = vpack.c.b16 %v2016, %v2015
    %v2059 = vpack.c.b16 %v2018, %v2017
    %v2060 = vpack.c.b16 %v2020, %v2019
    %v2061 = vpack.c.b16 %v2022, %v2021
    %v2062 = vpack.c.b16 %v2024, %v2023
    %v2063 = vpack.c.b16 %v2026, %v2025
    %v2064 = vpack.c.b16 %v2028, %v2027
    %v2065 = vpack.c.b16 %v2030, %v2029
    %v2066 = vpack.c.b16 %v2032, %v2031
    %v2067 = vpack.c.b16 %v2034, %v2033
    %v2068 = vpack.c.b16 %v2036, %v2035
    %2101 = vmatpush.bf16.msra.mxu0 %v2044
    %2102 = vmatpush.bf16.msra.mxu0 %v2043
    %2103 = vmatpush.bf16.msra.mxu0 %v2042
    %2104 = vmatpush.bf16.msra.mxu0 %v2041
    %2105 = vmatpush.bf16.msra.mxu0 %v2040
    %2106 = vmatpush.bf16.msra.mxu0 %v2039
    %2107 = vmatpush.bf16.msra.mxu0 %v2038
    %2108 = vmatpush.bf16.msra.mxu0 %v2037
    %2109 = vmatmul.bf16.gmra.mxu0 %v1839
    %v2110 = vpop.f32.mrf.mxu0
    %v2111 = vadd.f32 %v1908, %v2110
    %v2112 = vpop.f32.mrf.mxu0
    %2113 = vdwg.mxu0
    %2114 = vmatpush.bf16.msra.mxu0 %v2052
    %2115 = vmatpush.bf16.msra.mxu0 %v2051
    %2116 = vmatpush.bf16.msra.mxu0 %v2050
    %2117 = vmatpush.bf16.msra.mxu0 %v2049
    %2118 = vmatpush.bf16.msra.mxu0 %v2048
    %2119 = vmatpush.bf16.msra.mxu0 %v2047
    %2120 = vmatpush.bf16.msra.mxu0 %v2046
    %2121 = vmatpush.bf16.msra.mxu0 %v2045
    %2122 = vmatmul.bf16.gmra.mxu0 %v1840
    %v2123 = vpop.f32.mrf.mxu0
    %v2124 = vadd.f32 %v2111, %v2123
    %v2125 = vpop.f32.mrf.mxu0
    %2126 = vdwg.mxu0
    %2127 = vmatpush.bf16.msra.mxu0 %v2060
    %2128 = vmatpush.bf16.msra.mxu0 %v2059
    %2129 = vmatpush.bf16.msra.mxu0 %v2058
    %2130 = vmatpush.bf16.msra.mxu0 %v2057
    %2131 = vmatpush.bf16.msra.mxu0 %v2056
    %2132 = vmatpush.bf16.msra.mxu0 %v2055
    %2133 = vmatpush.bf16.msra.mxu0 %v2054
    %2134 = vmatpush.bf16.msra.mxu0 %v2053
    %2135 = vmatmul.bf16.gmra.mxu0 %v1841
    %v2136 = vpop.f32.mrf.mxu0
    %v2137 = vadd.f32 %v2124, %v2136
    %v2138 = vpop.f32.mrf.mxu0
    %2139 = vdwg.mxu0
    %2140 = vmatpush.bf16.msra.mxu0 %v2068
    %2141 = vmatpush.bf16.msra.mxu0 %v2067
    %2142 = vmatpush.bf16.msra.mxu0 %v2066
    %2143 = vmatpush.bf16.msra.mxu0 %v2065
    %2144 = vmatpush.bf16.msra.mxu0 %v2064
    %2145 = vmatpush.bf16.msra.mxu0 %v2063
    %2146 = vmatpush.bf16.msra.mxu0 %v2062
    %2147 = vmatpush.bf16.msra.mxu0 %v2061
    %2148 = vmatmul.bf16.gmra.mxu0 %v1842
    %v2149 = vpop.f32.mrf.mxu0
    %v2150 = vadd.f32 %v2137, %v2149
    %v2151 = vpop.f32.mrf.mxu0
    %2152 = vdwg.mxu0
    %v2153 = vmul.f32 %v2150, 0.5
    %v2154 = vmul.f32 %v2150, 0.70710677
    %vm2155 = vcmp.lt.f32.partialorder %v2154, 0.0
    %v2156 = vsel %vm2155, -1.0, 1.0
    %v2157 = vand.u32 2147483647, %v2154
    %v2158 = vmul.f32 %v2157, 0.3275911
    %v2159 = vadd.f32 %v2158, 1.0
    %v2160 = vrcp.pop %v2159
    %v2161 = vmul.f32 %v2159, %v2160
    %v2162 = vsub.f32 1.0, %v2161
    %v2163 = vmul.f32 %v2160, %v2162
    %v2164 = vadd.f32 %v2160, %v2163
    %vm2165 = vweird.f32 %v2159
    %vm2166 = vweird.f32 %v2160
    %vm2167 = vmor %vm2165, %vm2166
    %v2168 = vsel %vm2167, %v2160, %v2164
    %v2169 = vand.u32 2147483647, %v2159
    %vm2170 = vcmp.eq.f32.partialorder %v2169, 8.507059e+37
    %v2171 = vand.u32 %v2159, 2147483648
    %v2172 = vor.u32 1.1754944e-38, %v2171
    %v2173 = vsel %vm2170, %v2172, %v2168
    %v2174 = vmul.f32 1.0, %v2173
    %v2175 = vmul.f32 %v2174, 1.0614054
    %v2176 = vadd.f32 %v2175, -1.4531521
    %v2177 = vmul.f32 %v2174, %v2176
    %v2178 = vadd.f32 %v2177, 1.4214138
    %v2179 = vmul.f32 %v2174, %v2178
    %v2180 = vadd.f32 %v2179, -0.28449672
    %v2181 = vmul.f32 %v2174, %v2180
    %v2182 = vadd.f32 %v2181, 0.2548296
    %v2183 = vmul.f32 %v2174, %v2182
    %v2184 = vsub.f32 0.0, %v2157
    %v2185 = vmul.f32 %v2184, %v2157
    %v2186 = vmul.f32 %v2185, 1.442695
    %v2187 = vpow.pop %v2186
    %v2188 = vmul.f32 %v2183, %v2187
    %v2189 = vsub.f32 1.0, %v2188
    %v2190 = vmul.f32 %v2156, %v2189
    %v2191 = vadd.f32 %v2190, 1.0
    %v2192 = vmul.f32 %v2153, %v2191
    %v2194 = vrot.slane %v2192, 4
    %2195 = vrot.lane.b32.xlu0 %v2194, 96
    %v2196 = vpop.permute.xlu0 %2195
    %v2198 = vmax.f32 %v2192, %v2196
    %v2199 = vsub.f32 %v2192, %v2196
    %v2200 = vand.u32 2147483647, %v2199
    %v2201 = vmul.f32 %v2192, %v2196
    %2203 = vrot.lane.b32.xlu0 %v2192, 96
    %v2204 = vpop.permute.xlu0 %2203
    %v2206 = vsel %vm1120, %v2198, %v2194
    %v2207 = vsel %vm1120, %v2200, %v2204
    %v2208 = vpack.c.bf16 %v2207, %v2206
    %v2209 = vpack.c.bf16 %v2201, %v2201
    %v2210 = vld [vmem:[%s4 + $0x100] sm:$0xf]
    %v2211 = vld [vmem:[%s4 + $0x104] sm:$0xf]
    %v2212 = vld [vmem:[%s4 + $0x108] sm:$0xf]
    %v2213 = vld [vmem:[%s4 + $0x10c] sm:$0xf]
    %v2214 = vld [vmem:[%s5 + $0x28] sm:$0x1]
    %v2215 = vperm.slane %v2214, 0
    %v2220 = vunpack.c.l.b16 %v2210
    %v2221 = vunpack.c.l.b16 %v2211
    %v2222 = vunpack.c.l.b16 %v2212
    %v2223 = vunpack.c.l.b16 %v2213
    %v2224 = vpack.c.b16 %v2221, %v2220
    %v2225 = vpack.c.b16 %v2223, %v2222
    %v2229 = vsel %vm143, %v2208, 0
    %v2232 = vsel %vm143, %v2209, 0
    %2234 = vmatpush.bf16.msra.mxu0 0
    %2235 = vmatpush.bf16.msra.mxu0 0
    %2236 = vmatpush.bf16.msra.mxu0 0
    %2237 = vmatpush.bf16.msra.mxu0 0
    %2238 = vmatpush.bf16.msra.mxu0 0
    %2239 = vmatpush.bf16.msra.mxu0 0
    %2240 = vmatpush.bf16.msra.mxu0 %v2225
    %2241 = vmatpush.bf16.msra.mxu0 %v2224
    %2242 = vmatmul.bf16.gmra.mxu0 %v2229
    %v2243 = vpop.f32.mrf.mxu0
    %v2244 = vadd.f32 %v2215, %v2243
    %v2245 = vpop.f32.mrf.mxu0
    %v2246 = vadd.f32 %v2215, %v2245
    %2247 = vmatmul.bf16.gmra.mxu0 %v2232
    %v2248 = vpop.f32.mrf.mxu0
    %v2249 = vadd.f32 %v2215, %v2248
    %v2250 = vpop.f32.mrf.mxu0
    %2251 = vdwg.mxu0
    %v2252 = vld [vmem:[%s5 + $0x38] sm:$0xf]
    %v2256 = vrot.slane %v2244, 4
    %v2257 = vrot.slane %v2246, 4
    %v2258 = vsel %vm1120, %v2256, %v2257
    %v2259 = vrot.slane %v2249, 4
    %v2260 = vsel %vm1120, %v2257, %v2259
    %v2264 = vsel %vm1120, %v2249, %v2256
    %v2265 = vmul.f32 %v2244, %v102
    %v2266 = vmul.f32 %v2246, %v103
    %v2267 = vmul.f32 %v2264, %v104
    %v2268 = vmul.f32 %v2258, %v105
    %v2269 = vmul.f32 %v2260, %v106
    %v2270 = vmul.f32 %v2244, %v107
    %v2271 = vmul.f32 %v2246, %v108
    %v2272 = vmul.f32 %v2264, %v109
    %v2273 = vmul.f32 %v2258, %v110
    %v2274 = vmul.f32 %v2260, %v111
    %v2275 = vpack.c.bf16 %v2266, %v2265
    %v2276 = vpack.c.bf16 %v2268, %v2267
    %v2277 = vpack.c.bf16 %v2270, %v2269
    %v2278 = vpack.c.bf16 %v2272, %v2271
    %v2279 = vpack.c.bf16 %v2274, %v2273
    %2290 = vrot.lane.b32.xlu0 %v102, 32
    %v2291 = vpop.permute.xlu0 %2290
    %2292 = vrot.lane.b32.xlu0 %v103, 32
    %v2293 = vpop.permute.xlu0 %2292
    %2294 = vrot.lane.b32.xlu0 %v104, 32
    %v2295 = vpop.permute.xlu0 %2294
    %2296 = vrot.lane.b32.xlu0 %v105, 32
    %v2297 = vpop.permute.xlu0 %2296
    %2298 = vrot.lane.b32.xlu0 %v106, 32
    %v2299 = vpop.permute.xlu0 %2298
    %2300 = vrot.lane.b32.xlu0 %v107, 32
    %v2301 = vpop.permute.xlu0 %2300
    %2302 = vrot.lane.b32.xlu0 %v108, 32
    %v2303 = vpop.permute.xlu0 %2302
    %2304 = vrot.lane.b32.xlu0 %v109, 32
    %v2305 = vpop.permute.xlu0 %2304
    %2306 = vrot.lane.b32.xlu0 %v110, 32
    %v2307 = vpop.permute.xlu0 %2306
    %2308 = vrot.lane.b32.xlu0 %v111, 32
    %v2309 = vpop.permute.xlu0 %2308
    %v2320 = vmul.f32 %v2244, %v2291
    %v2321 = vmul.f32 %v2246, %v2293
    %v2322 = vmul.f32 %v2264, %v2295
    %v2323 = vmul.f32 %v2258, %v2297
    %v2324 = vmul.f32 %v2260, %v2299
    %v2325 = vmul.f32 %v2244, %v2301
    %v2326 = vmul.f32 %v2246, %v2303
    %v2327 = vmul.f32 %v2264, %v2305
    %v2328 = vmul.f32 %v2258, %v2307
    %v2329 = vmul.f32 %v2260, %v2309
    %v2330 = vpack.c.bf16 %v2321, %v2320
    %v2331 = vpack.c.bf16 %v2323, %v2322
    %v2332 = vpack.c.bf16 %v2325, %v2324
    %v2333 = vpack.c.bf16 %v2327, %v2326
    %v2334 = vpack.c.bf16 %v2329, %v2328
    %v2335 = vpack.c.bf16 %v2252, %v2252
    %v2337 = vsel %vm143, %v2335, 0
    %v2340 = vsel %vm143, %v2275, 0
    %v2343 = vsel %vm143, %v2276, 0
    %v2346 = vsel %vm143, %v2277, 0
    %v2349 = vsel %vm143, %v2278, 0
    %v2352 = vsel %vm143, %v2279, 0
    %2354 = vmatpush.bf16.xpose.msra.mxu0 0
    %2355 = vmatpush.bf16.xpose.msra.mxu0 0
    %2356 = vmatpush.bf16.xpose.msra.mxu0 0
    %2357 = vmatpush.bf16.xpose.msra.mxu0 %v2352
    %2358 = vmatpush.bf16.xpose.msra.mxu0 %v2349
    %2359 = vmatpush.bf16.xpose.msra.mxu0 %v2346
    %2360 = vmatpush.bf16.xpose.msra.mxu0 %v2343
    %2361 = vmatpush.bf16.xpose.msra.mxu0 %v2340
    %2362 = vmatmul.bf16.gmra.mxu0 %v2337
    %v2363 = vpop.f32.mrf.mxu0
    %v2364 = vadd.f32 %v122, %v2363
    %v2365 = vpop.f32.mrf.mxu0
    %2366 = vdwg.mxu0
    %vm2367 = vcmask 650240
    %v2368 = vsel %vm2367, %v2364, -inf
    %2369 = vmax.xlane.f32.xlu0 %v2368
    %v2370 = vpop.xlane.xlu0 %2369
    %v2371 = vsub.f32 %v2364, %v2370
    %v2372 = vmul.f32 %v2371, 1.442695
    %v2373 = vpow.pop %v2372
    %vm2374 = vcmask 654336
    %v2376 = vsel %vm2374, %v2373, 0
    %2378 = vmatpush.msra.mxu0 0.0
    %2379 = vmatpush.msra.mxu0 0.0
    %2380 = vmatpush.msra.mxu0 0.0
    %2381 = vmatpush.msra.mxu0 0.0
    %2382 = vmatpush.msra.mxu0 0.0
    %2383 = vmatpush.msra.mxu0 0.0
    %2384 = vmatpush.msra.mxu0 %v121
    %2385 = vmatpush.msra.mxu0 %v120
    %2386 = vmatpush.msra.mxu0 %v119
    %2387 = vmatpush.msra.mxu0 %v118
    %2388 = vmatpush.msra.mxu0 %v117
    %2389 = vmatpush.msra.mxu0 %v116
    %2390 = vmatpush.msra.mxu0 %v115
    %2391 = vmatpush.msra.mxu0 %v114
    %2392 = vmatpush.msra.mxu0 %v113
    %2393 = vmatpush.msra.mxu0 %v112
    %2394 = vmatmul.f32.gmra.mxu0 %v2376
    %v2395 = vpop.f32.mrf.mxu0
    %v2396 = vadd.f32 1e-30, %v2395
    %2397 = vdwg.mxu0
    %v2398 = vrcp.pop %v2396
    %v2399 = vmul.f32 %v2396, %v2398
    %v2400 = vsub.f32 1.0, %v2399
    %v2401 = vmul.f32 %v2398, %v2400
    %v2402 = vadd.f32 %v2398, %v2401
    %vm2403 = vweird.f32 %v2396
    %vm2404 = vweird.f32 %v2398
    %vm2405 = vmor %vm2403, %vm2404
    %v2406 = vsel %vm2405, %v2398, %v2402
    %v2407 = vand.u32 2147483647, %v2396
    %vm2408 = vcmp.eq.f32.partialorder %v2407, 8.507059e+37
    %v2409 = vand.u32 %v2396, 2147483648
    %v2410 = vor.u32 1.1754944e-38, %v2409
    %v2411 = vsel %vm2408, %v2410, %v2406
    %v2412 = vmul.f32 %v2373, %v2411
    %v2413 = vpack.c.bf16 %v2412, %v2412
    %2419 = vrot.lane.b32.xlu0 %v2330, 96
    %v2420 = vpop.permute.xlu0 %2419
    %2421 = vrot.lane.b32.xlu0 %v2331, 96
    %v2422 = vpop.permute.xlu0 %2421
    %2423 = vrot.lane.b32.xlu0 %v2332, 96
    %v2424 = vpop.permute.xlu0 %2423
    %2425 = vrot.lane.b32.xlu0 %v2333, 96
    %v2426 = vpop.permute.xlu0 %2425
    %2427 = vrot.lane.b32.xlu0 %v2334, 96
    %v2428 = vpop.permute.xlu0 %2427
    %v2435 = vsel %vm2374, %v2413, 0
    %2437 = vmatpush.bf16.msra.mxu0 0
    %2438 = vmatpush.bf16.msra.mxu0 0
    %2439 = vmatpush.bf16.msra.mxu0 0
    %2440 = vmatpush.bf16.msra.mxu0 %v2428
    %2441 = vmatpush.bf16.msra.mxu0 %v2426
    %2442 = vmatpush.bf16.msra.mxu0 %v2424
    %2443 = vmatpush.bf16.msra.mxu0 %v2422
    %2444 = vmatpush.bf16.msra.mxu0 %v2420
    %2445 = vmatmul.bf16.gmra.mxu0 %v2435
    %v2446 = vpop.f32.mrf.mxu0
    %v2447 = vadd.f32 0.0, %v2446
    %v2448 = vpop.f32.mrf.mxu0
    %2449 = vdwg.mxu0
    %v2450 = vpack.c.bf16 %v2447, %v2447
    %v2451 = vld [vmem:[%s4 + $0x110] sm:$0xf]
    %v2452 = vld [vmem:[%s4 + $0x114] sm:$0xf]
    %v2453 = vld [vmem:[%s4 + $0x118] sm:$0xf]
    %v2454 = vld [vmem:[%s4 + $0x11c] sm:$0xf]
    %v2455 = vld [vmem:[%s5 + $0x30] sm:$0x1]
    %v2456 = vperm.slane %v2455, 0
    %v2461 = vunpack.c.l.b16 %v2451
    %v2462 = vunpack.c.l.b16 %v2452
    %v2463 = vunpack.c.l.b16 %v2453
    %v2464 = vunpack.c.l.b16 %v2454
    %v2465 = vpack.c.b16 %v2462, %v2461
    %v2466 = vpack.c.b16 %v2464, %v2463
    %v2470 = vsel %vm143, %v2450, 0
    %2472 = vmatpush.bf16.msra.mxu0 0
    %2473 = vmatpush.bf16.msra.mxu0 0
    %2474 = vmatpush.bf16.msra.mxu0 0
    %2475 = vmatpush.bf16.msra.mxu0 0
    %2476 = vmatpush.bf16.msra.mxu0 0
    %2477 = vmatpush.bf16.msra.mxu0 0
    %2478 = vmatpush.bf16.msra.mxu0 %v2466
    %2479 = vmatpush.bf16.msra.mxu0 %v2465
    %2480 = vmatmul.bf16.gmra.mxu0 %v2470
    %v2481 = vpop.f32.mrf.mxu0
    %v2482 = vadd.f32 %v2456, %v2481
    %v2483 = vpop.f32.mrf.mxu0
    %2484 = vdwg.mxu0
    %vm2485 = vcmask 257024
    %v2486 = vsel %vm2485, %v2482, -inf
    %2487 = vmax.xlane.f32.xlu0 %v2486
    %v2488 = vpop.xlane.xlu0 %2487
    %v2489 = vsub.f32 %v2482, %v2488
    %v2490 = vmul.f32 %v2489, 1.442695
    %v2491 = vpow.pop %v2490
    %v2492 = vsel %vm2485, %v2491, 0.0
    %2493 = vadd.xlane.f32.xlu0 %v2492
    %v2494 = vpop.xlane.xlu0 %2493
    %v2495 = vrcp.pop %v2494
    %v2496 = vmul.f32 %v2494, %v2495
    %v2497 = vsub.f32 1.0, %v2496
    %v2498 = vmul.f32 %v2495, %v2497
    %v2499 = vadd.f32 %v2495, %v2498
    %vm2500 = vweird.f32 %v2494
    %vm2501 = vweird.f32 %v2495
    %vm2502 = vmor %vm2500, %vm2501
    %v2503 = vsel %vm2502, %v2495, %v2499
    %v2504 = vand.u32 2147483647, %v2494
    %vm2505 = vcmp.eq.f32.partialorder %v2504, 8.507059e+37
    %v2506 = vand.u32 %v2494, 2147483648
    %v2507 = vor.u32 1.1754944e-38, %v2506
    %v2508 = vsel %vm2505, %v2507, %v2503
    %v2509 = vmul.f32 %v2491, %v2508
    %2510 = vst.msk [vmem:[#allocation7] sm:$0xf] %vm2485, %v2509
    // Predicated region
    $region34: #{core_matching_forward.1} parent=1 // pred_check
      _
    $region35: #{core_matching_forward.1} parent=1 // pred_check_branch
      %2512 = sbr.rel (0) target = $region37
    $region36: #{core_matching_forward.1} parent=1 // pred_region
      %2514 = vsyncadd [#allocation4], 0
      %s2516 = sshll.u32 [#allocation7], 4
      %s2517 = int_to_ptr.vmem [resolvable:$true] %s2516
      %s2518 = sshll.u32 %s6, 4
      %s2519 = int_to_ptr.hbm [resolvable:$true] %s2518
      %2521 = dma.vmem_to_hbm [thread:$0]  %s2517, 64, %s2519, [#allocation4]
    $region37: #{core_matching_forward.1} parent=1 // pred_fallthru
      _
    // Predicated region
    $region38: #{core_matching_forward.1} parent=1 // pred_check
      _
    $region39: #{core_matching_forward.1} parent=1 // pred_check_branch
      %2523 = sbr.rel (0) target = $region41
    $region40: #{core_matching_forward.1} parent=1 // pred_region
      %2525 = dma.done [#allocation4], 64
    $region41: #{core_matching_forward.1} parent=1 // pred_fallthru
      _
    %2526 = vsyncpa [#allocation3], 1
    %2527 = vsyncpa [#allocation6], 1
    %2528 = vsyncpa [#allocation4], 1

</llo_original>
